<compile_context>
chip_gen: v7x
topology: tpu7x:2x2x1
jax: 0.10.0
libtpu: 0.0.40
codegen_flags: <defaults>
</compile_context>

<pallas_src>
import jax
import jax.numpy as jnp
from jax import lax
from jax.experimental import pallas as pl
from jax.experimental.pallas import tpu as pltpu

NEG_SLOPE = 0.01   # PyTorch default LeakyReLU slope
BN_EPS = 1e-5      # PyTorch default BatchNorm eps
HIDDEN = 64        # DenseQuery hidden_size fixed to 64 in NodeEmbedding


def _leaky(x):
    return jnp.where(x >= 0, x, NEG_SLOPE * x)


def _batchnorm_train(x, gamma, beta):
    # nn.BatchNorm1d training mode (biased batch variance), affine folded into
    # one scale/shift:  s = gamma*rsqrt(var+eps);  y = s*x + (beta - s*mu)
    mu = jnp.mean(x, axis=0, keepdims=True)
    var = jnp.mean((x - mu) ** 2, axis=0, keepdims=True)
    s = gamma * lax.rsqrt(var + BN_EPS)
    return s * x + (beta - s * mu)


def _softmax_lastdim(z):
    z = z - jnp.max(z, axis=-1, keepdims=True)
    e = jnp.exp(z)
    return e * pl.reciprocal(jnp.sum(e, axis=-1, keepdims=True), approx=True)


def node_embedding_kernel(xl_ref, xh_ref, w1l_ref, w1h_ref,
                          b1l, g1l, be1l, w2l, b2l, g2l, be2l, w3l, b3l,
                          b1h, g1h, be1h, w2h, b2h, g2h, be2h, w3h, b3h,
                          low_bank_ref, high_bank_ref,
                          out_ref, accl_ref, acch_ref):
    k = pl.program_id(0)

    @pl.when(k == 0)
    def _init():
        accl_ref[...] = jnp.zeros_like(accl_ref)
        acch_ref[...] = jnp.zeros_like(acch_ref)

    # First Linear of each DenseQuery, K-tiled.  The PyTorch node-first
    # transpose is folded in as a transposed-LHS contraction:
    #   (tk, N)^T @ (tk, H) -> (N, H)
    dn = (((0,), (0,)), ((), ()))
    accl_ref[...] += lax.dot_general(xl_ref[...], w1l_ref[...], dn,
                                     preferred_element_type=jnp.float32)
    acch_ref[...] += lax.dot_general(xh_ref[...], w1h_ref[...], dn,
                                     preferred_element_type=jnp.float32)

    @pl.when(k == pl.num_programs(0) - 1)
    def _finalize():
        def tail(h1, b1, g1, be1, w2, b2, g2, be2, w3, b3, bank):
            # Small params are indexed here (point of use), not at kernel top.
            h = _leaky(_batchnorm_train(h1 + b1[...], g1[...], be1[...]))
            h = jnp.dot(h, w2[...], preferred_element_type=jnp.float32) + b2[...]
            h = _leaky(_batchnorm_train(h, g2[...], be2[...]))
            z = jnp.dot(h, w3[...], preferred_element_type=jnp.float32) + b3[...]
            q = _softmax_lastdim(z)
            return _leaky(jnp.dot(q, bank[...],
                                  preferred_element_type=jnp.float32))

        node_low = tail(accl_ref[...], b1l, g1l, be1l, w2l, b2l, g2l, be2l,
                        w3l, b3l, low_bank_ref)
        node_high = tail(acch_ref[...], b1h, g1h, be1h, w2h, b2h, g2h, be2h,
                         w3h, b3h, high_bank_ref)
        out_ref[...] = 3.0 * (node_low + node_high)


def _choose_tk(bs):
    # Largest K-tile (multiple of 8 sublanes) that evenly divides B*S.
    for cand in (2048, 1024, 512, 256, 128, 64, 32, 16, 8):
        if bs % cand == 0:
            return cand
    return bs


def node_embedding_forward(low_frequency, high_frequency, params):
    """low/high_frequency: (batch, seq, node_size) float32 (PyTorch layout)."""
    B, S, N = low_frequency.shape
    BS = B * S
    D = params["low_bank"].shape[1]

    # Free row-major merge (no data movement).  The node-first permute of the
    # PyTorch code is folded into the in-kernel transposed-LHS dot_general,
    # eliminating an extra HBM read+write pass over the activations.
    xl = low_frequency.reshape(BS, N)
    xh = high_frequency.reshape(BS, N)

    w1l, *rest_low = params["low"]
    w1h, *rest_high = params["high"]
    low_bank, high_bank = params["low_bank"], params["high_bank"]

    tk = _choose_tk(BS)
    k_steps = BS // tk

    def const_spec(a):
        nd = a.ndim
        return pl.BlockSpec(a.shape, lambda k, _nd=nd: (0,) * _nd)

    in_specs = ([pl.BlockSpec((tk, N), lambda k: (k, 0)),
                 pl.BlockSpec((tk, N), lambda k: (k, 0)),
                 pl.BlockSpec((tk, HIDDEN), lambda k: (k, 0)),
                 pl.BlockSpec((tk, HIDDEN), lambda k: (k, 0))]
                + [const_spec(p) for p in rest_low]
                + [const_spec(p) for p in rest_high]
                + [const_spec(low_bank), const_spec(high_bank)])

    out_spec = pl.BlockSpec((N, D), lambda k: (0, 0))

    # Advisory cost estimate (both query nets).
    flops = (2 * 2 * N * BS * HIDDEN          # first linears (K-tiled)
             + 2 * 2 * N * HIDDEN * HIDDEN    # second linears
             + 2 * 2 * N * HIDDEN * N         # third linears
             + 2 * 2 * N * N * D)             # memory-bank lookups
    small = sum(int(p.size) for p in rest_low) + sum(int(p.size) for p in rest_high)
    bytes_accessed = 4 * (2 * BS * N + 2 * BS * HIDDEN + small + 2 * N * D + N * D)
    cost = pl.CostEstimate(flops=flops, transcendentals=2 * N * N,
                           bytes_accessed=bytes_accessed)

    # VMEM budget: double-buffered K-tiles (2 nets) + resident small params,
    # banks, output and accumulators, with 2x headroom; clamped to stay well
    # under v7x's 64 MiB physical VMEM while covering v5e's 16 MiB default.
    resident_f32 = small + 2 * N * D + N * D + 2 * N * HIDDEN
    tiled_f32 = 2 * 2 * tk * (N + HIDDEN)
    vmem_limit = int(min(48 * 1024 * 1024,
                         max(16 * 1024 * 1024,
                             2 * 4 * (resident_f32 + tiled_f32) + (2 << 20))))

    flat_inputs = ([xl, xh, w1l, w1h] + rest_low + rest_high
                   + [low_bank, high_bank])

    return pl.pallas_call(
        node_embedding_kernel,
        out_shape=jax.ShapeDtypeStruct((N, D), jnp.float32),
        grid_spec=pltpu.PrefetchScalarGridSpec(
            num_scalar_prefetch=0,
            grid=(k_steps,),
            in_specs=in_specs,
            out_specs=out_spec,
            scratch_shapes=[pltpu.VMEM((N, HIDDEN), jnp.float32),
                            pltpu.VMEM((N, HIDDEN), jnp.float32)]),
        compiler_params=pltpu.CompilerParams(
            # The single grid axis is the K reduction of the first Linear, so
            # it must be "arbitrary".  Node rows are not tiled (BatchNorm1d
            # statistics are over node rows), so there is no parallel axis.
            dimension_semantics=("arbitrary",),
            vmem_limit_bytes=vmem_limit),
        cost_estimate=cost,
    )(*flat_inputs)


def init_params(key, node_size, node_dim, sequence_len, batch_size):
    input_size = batch_size * sequence_len

    def dense_query_params(k):
        ks = jax.random.split(k, 6)
        W1 = 0.1 * jax.random.normal(ks[0], (input_size, HIDDEN), jnp.float32)
        b1 = 0.1 * jax.random.normal(ks[1], (1, HIDDEN), jnp.float32)
        g1 = jnp.ones((1, HIDDEN), jnp.float32)     # BatchNorm default affine
        be1 = jnp.zeros((1, HIDDEN), jnp.float32)
        W2 = 0.1 * jax.random.normal(ks[2], (HIDDEN, HIDDEN), jnp.float32)
        b2 = 0.1 * jax.random.normal(ks[3], (1, HIDDEN), jnp.float32)
        g2 = jnp.ones((1, HIDDEN), jnp.float32)
        be2 = jnp.zeros((1, HIDDEN), jnp.float32)
        W3 = 0.1 * jax.random.normal(ks[4], (HIDDEN, node_size), jnp.float32)
        b3 = 0.1 * jax.random.normal(ks[5], (1, node_size), jnp.float32)
        return [W1, b1, g1, be1, W2, b2, g2, be2, W3, b3]

    k_low, k_high, k_lb, k_hb = jax.random.split(key, 4)
    return {
        "low": dense_query_params(k_low),
        "high": dense_query_params(k_high),
        "low_bank": jax.random.normal(k_lb, (node_size, node_dim), jnp.float32),
        "high_bank": jax.random.normal(k_hb, (node_size, node_dim), jnp.float32),
    }


if __name__ == "__main__":
    node_size = 16
    node_dim = 32
    sequence_len = 8
    batch_size = 2

    key = jax.random.PRNGKey(0)
    k_params, k_low, k_high = jax.random.split(key, 3)

    params = init_params(k_params, node_size, node_dim, sequence_len, batch_size)
    low_frequency = jax.random.normal(
        k_low, (batch_size, sequence_len, node_size), jnp.float32)
    high_frequency = jax.random.normal(
        k_high, (batch_size, sequence_len, node_size), jnp.float32)

    # TODO(synk): train-mode BatchNorm running-stat (running_mean/var) updates
    # are intentionally omitted; only the forward activations are computed.
    out = node_embedding_forward(low_frequency, high_frequency, params)
    out = jax.block_until_ready(out)
    assert out.shape == (node_size, node_dim)
    assert out.dtype == jnp.float32
    print("KERNEL_OK")
</pallas_src>

<mosaic_0001>
module attributes {stable_mosaic.version = 11 : i64} {
  func.func @node_embedding_kernel(%arg0: i32, %arg1: memref<16x16xf32, #tpu.memory_space<vmem>>, %arg2: memref<16x16xf32, #tpu.memory_space<vmem>>, %arg3: memref<16x64xf32, #tpu.memory_space<vmem>>, %arg4: memref<16x64xf32, #tpu.memory_space<vmem>>, %arg5: memref<1x64xf32, #tpu.memory_space<vmem>>, %arg6: memref<1x64xf32, #tpu.memory_space<vmem>>, %arg7: memref<1x64xf32, #tpu.memory_space<vmem>>, %arg8: memref<64x64xf32, #tpu.memory_space<vmem>>, %arg9: memref<1x64xf32, #tpu.memory_space<vmem>>, %arg10: memref<1x64xf32, #tpu.memory_space<vmem>>, %arg11: memref<1x64xf32, #tpu.memory_space<vmem>>, %arg12: memref<64x16xf32, #tpu.memory_space<vmem>>, %arg13: memref<1x16xf32, #tpu.memory_space<vmem>>, %arg14: memref<1x64xf32, #tpu.memory_space<vmem>>, %arg15: memref<1x64xf32, #tpu.memory_space<vmem>>, %arg16: memref<1x64xf32, #tpu.memory_space<vmem>>, %arg17: memref<64x64xf32, #tpu.memory_space<vmem>>, %arg18: memref<1x64xf32, #tpu.memory_space<vmem>>, %arg19: memref<1x64xf32, #tpu.memory_space<vmem>>, %arg20: memref<1x64xf32, #tpu.memory_space<vmem>>, %arg21: memref<64x16xf32, #tpu.memory_space<vmem>>, %arg22: memref<1x16xf32, #tpu.memory_space<vmem>>, %arg23: memref<16x32xf32, #tpu.memory_space<vmem>>, %arg24: memref<16x32xf32, #tpu.memory_space<vmem>>, %arg25: memref<16x32xf32, #tpu.memory_space<vmem>>, %arg26: memref<16x64xf32, #tpu.memory_space<vmem>>, %arg27: memref<16x64xf32, #tpu.memory_space<vmem>>) attributes {dimension_semantics = [#tpu.dimension_semantics<arbitrary>], iteration_bounds = array<i64: 1>, scalar_prefetch = 0 : i64, scratch_operands = 2 : i64, tpu.core_type = #tpu.core_type<tc>, window_params = [{transform_indices = @transform_0, window_bounds = array<i64: 16, 16>}, {transform_indices = @transform_1, window_bounds = array<i64: 16, 16>}, {transform_indices = @transform_2, window_bounds = array<i64: 16, 64>}, {transform_indices = @transform_3, window_bounds = array<i64: 16, 64>}, {pipeline_mode = #tpu.pipeline_mode<synchronous>, transform_indices = @transform_4, window_bounds = array<i64: 1, 64>}, {pipeline_mode = #tpu.pipeline_mode<synchronous>, transform_indices = @transform_5, window_bounds = array<i64: 1, 64>}, {pipeline_mode = #tpu.pipeline_mode<synchronous>, transform_indices = @transform_6, window_bounds = array<i64: 1, 64>}, {pipeline_mode = #tpu.pipeline_mode<synchronous>, transform_indices = @transform_7, window_bounds = array<i64: 64, 64>}, {pipeline_mode = #tpu.pipeline_mode<synchronous>, transform_indices = @transform_8, window_bounds = array<i64: 1, 64>}, {pipeline_mode = #tpu.pipeline_mode<synchronous>, transform_indices = @transform_9, window_bounds = array<i64: 1, 64>}, {pipeline_mode = #tpu.pipeline_mode<synchronous>, transform_indices = @transform_10, window_bounds = array<i64: 1, 64>}, {pipeline_mode = #tpu.pipeline_mode<synchronous>, transform_indices = @transform_11, window_bounds = array<i64: 64, 16>}, {pipeline_mode = #tpu.pipeline_mode<synchronous>, transform_indices = @transform_12, window_bounds = array<i64: 1, 16>}, {pipeline_mode = #tpu.pipeline_mode<synchronous>, transform_indices = @transform_13, window_bounds = array<i64: 1, 64>}, {pipeline_mode = #tpu.pipeline_mode<synchronous>, transform_indices = @transform_14, window_bounds = array<i64: 1, 64>}, {pipeline_mode = #tpu.pipeline_mode<synchronous>, transform_indices = @transform_15, window_bounds = array<i64: 1, 64>}, {pipeline_mode = #tpu.pipeline_mode<synchronous>, transform_indices = @transform_16, window_bounds = array<i64: 64, 64>}, {pipeline_mode = #tpu.pipeline_mode<synchronous>, transform_indices = @transform_17, window_bounds = array<i64: 1, 64>}, {pipeline_mode = #tpu.pipeline_mode<synchronous>, transform_indices = @transform_18, window_bounds = array<i64: 1, 64>}, {pipeline_mode = #tpu.pipeline_mode<synchronous>, transform_indices = @transform_19, window_bounds = array<i64: 1, 64>}, {pipeline_mode = #tpu.pipeline_mode<synchronous>, transform_indices = @transform_20, window_bounds = array<i64: 64, 16>}, {pipeline_mode = #tpu.pipeline_mode<synchronous>, transform_indices = @transform_21, window_bounds = array<i64: 1, 16>}, {pipeline_mode = #tpu.pipeline_mode<synchronous>, transform_indices = @transform_22, window_bounds = array<i64: 16, 32>}, {pipeline_mode = #tpu.pipeline_mode<synchronous>, transform_indices = @transform_23, window_bounds = array<i64: 16, 32>}, {pipeline_mode = #tpu.pipeline_mode<synchronous>, transform_indices = @transform_24, window_bounds = array<i64: 16, 32>}]} {
    %c0_i32 = arith.constant 0 : i32
    %0 = arith.cmpi eq, %arg0, %c0_i32 : i32
    %1 = arith.extui %0 : i1 to i32
    %c0_i32_0 = arith.constant 0 : i32
    %2 = arith.cmpi ne, %1, %c0_i32_0 : i32
    scf.if %2 {
      %cst_19 = arith.constant 0.000000e+00 : f32
      %18 = vector.broadcast %cst_19 : f32 to vector<16x64xf32>
      %c0_20 = arith.constant 0 : index
      %c0_21 = arith.constant 0 : index
      %19 = vector.load %arg26[%c0_20, %c0_21] : memref<16x64xf32, #tpu.memory_space<vmem>>, vector<16x64xf32>
      tpu.vector_store %arg26[%c0_20, %c0_21], %18 {strides = array<i32>} : memref<16x64xf32, #tpu.memory_space<vmem>>, vector<16x64xf32>,
      %cst_22 = arith.constant 0.000000e+00 : f32
      %20 = vector.broadcast %cst_22 : f32 to vector<16x64xf32>
      %c0_23 = arith.constant 0 : index
      %c0_24 = arith.constant 0 : index
      %21 = vector.load %arg27[%c0_23, %c0_24] : memref<16x64xf32, #tpu.memory_space<vmem>>, vector<16x64xf32>
      tpu.vector_store %arg27[%c0_23, %c0_24], %20 {strides = array<i32>} : memref<16x64xf32, #tpu.memory_space<vmem>>, vector<16x64xf32>,
    } else {
    }
    %c0 = arith.constant 0 : index
    %c0_1 = arith.constant 0 : index
    %3 = vector.load %arg26[%c0, %c0_1] : memref<16x64xf32, #tpu.memory_space<vmem>>, vector<16x64xf32>
    %c0_2 = arith.constant 0 : index
    %c0_3 = arith.constant 0 : index
    %4 = vector.load %arg1[%c0_2, %c0_3] : memref<16x16xf32, #tpu.memory_space<vmem>>, vector<16x16xf32>
    %c0_4 = arith.constant 0 : index
    %c0_5 = arith.constant 0 : index
    %5 = vector.load %arg3[%c0_4, %c0_5] : memref<16x64xf32, #tpu.memory_space<vmem>>, vector<16x64xf32>
    %cst = arith.constant dense<0.000000e+00> : vector<16x64xf32>
    %6 = tpu.matmul %4, %5, %cst {dimension_numbers = #tpu.dot_dimension_numbers<[0], [0], [1], [1], [0, 1, 1, 1], [], []>} : vector<16x16xf32>, vector<16x64xf32>, vector<16x64xf32> -> vector<16x64xf32>
    %7 = arith.addf %3, %6 : vector<16x64xf32>
    %c0_6 = arith.constant 0 : index
    %c0_7 = arith.constant 0 : index
    %8 = vector.load %arg26[%c0_6, %c0_7] : memref<16x64xf32, #tpu.memory_space<vmem>>, vector<16x64xf32>
    tpu.vector_store %arg26[%c0_6, %c0_7], %7 {strides = array<i32>} : memref<16x64xf32, #tpu.memory_space<vmem>>, vector<16x64xf32>,
    %c0_8 = arith.constant 0 : index
    %c0_9 = arith.constant 0 : index
    %9 = vector.load %arg27[%c0_8, %c0_9] : memref<16x64xf32, #tpu.memory_space<vmem>>, vector<16x64xf32>
    %c0_10 = arith.constant 0 : index
    %c0_11 = arith.constant 0 : index
    %10 = vector.load %arg2[%c0_10, %c0_11] : memref<16x16xf32, #tpu.memory_space<vmem>>, vector<16x16xf32>
    %c0_12 = arith.constant 0 : index
    %c0_13 = arith.constant 0 : index
    %11 = vector.load %arg4[%c0_12, %c0_13] : memref<16x64xf32, #tpu.memory_space<vmem>>, vector<16x64xf32>
    %cst_14 = arith.constant dense<0.000000e+00> : vector<16x64xf32>
    %12 = tpu.matmul %10, %11, %cst_14 {dimension_numbers = #tpu.dot_dimension_numbers<[0], [0], [1], [1], [0, 1, 1, 1], [], []>} : vector<16x16xf32>, vector<16x64xf32>, vector<16x64xf32> -> vector<16x64xf32>
    %13 = arith.addf %9, %12 : vector<16x64xf32>
    %c0_15 = arith.constant 0 : index
    %c0_16 = arith.constant 0 : index
    %14 = vector.load %arg27[%c0_15, %c0_16] : memref<16x64xf32, #tpu.memory_space<vmem>>, vector<16x64xf32>
    tpu.vector_store %arg27[%c0_15, %c0_16], %13 {strides = array<i32>} : memref<16x64xf32, #tpu.memory_space<vmem>>, vector<16x64xf32>,
    %c0_i32_17 = arith.constant 0 : i32
    %15 = arith.cmpi eq, %arg0, %c0_i32_17 : i32
    %16 = arith.extui %15 : i1 to i32
    %c0_i32_18 = arith.constant 0 : i32
    %17 = arith.cmpi ne, %16, %c0_i32_18 : i32
    scf.if %17 {
      %c0_19 = arith.constant 0 : index
      %c0_20 = arith.constant 0 : index
      %18 = vector.load %arg26[%c0_19, %c0_20] : memref<16x64xf32, #tpu.memory_space<vmem>>, vector<16x64xf32>
      %c0_21 = arith.constant 0 : index
      %c0_22 = arith.constant 0 : index
      %19 = vector.load %arg5[%c0_21, %c0_22] : memref<1x64xf32, #tpu.memory_space<vmem>>, vector<1x64xf32>
      %20 = vector.broadcast %19 : vector<1x64xf32> to vector<16x64xf32>
      %21 = arith.addf %18, %20 : vector<16x64xf32>
      %c0_23 = arith.constant 0 : index
      %c0_24 = arith.constant 0 : index
      %22 = vector.load %arg6[%c0_23, %c0_24] : memref<1x64xf32, #tpu.memory_space<vmem>>, vector<1x64xf32>
      %c0_25 = arith.constant 0 : index
      %c0_26 = arith.constant 0 : index
      %23 = vector.load %arg7[%c0_25, %c0_26] : memref<1x64xf32, #tpu.memory_space<vmem>>, vector<1x64xf32>
      %cst_27 = arith.constant dense<0.000000e+00> : vector<64xf32>
      %24 = vector.multi_reduction <add>, %21, %cst_27 [0] : vector<16x64xf32> to vector<64xf32>
      %25 = vector.shape_cast %24 : vector<64xf32> to vector<1x64xf32>
      %cst_28 = arith.constant 1.600000e+01 : f32
      %26 = vector.broadcast %cst_28 : f32 to vector<1x64xf32>
      %27 = arith.divf %25, %26 : vector<1x64xf32>
      %28 = vector.broadcast %27 : vector<1x64xf32> to vector<16x64xf32>
      %29 = arith.subf %21, %28 : vector<16x64xf32>
      %30 = arith.mulf %29, %29 : vector<16x64xf32>
      %cst_29 = arith.constant dense<0.000000e+00> : vector<64xf32>
      %31 = vector.multi_reduction <add>, %30, %cst_29 [0] : vector<16x64xf32> to vector<64xf32>
      %32 = vector.shape_cast %31 : vector<64xf32> to vector<1x64xf32>
      %cst_30 = arith.constant 1.600000e+01 : f32
      %33 = vector.broadcast %cst_30 : f32 to vector<1x64xf32>
      %34 = arith.divf %32, %33 : vector<1x64xf32>
      %cst_31 = arith.constant 9.99999974E-6 : f32
      %35 = vector.broadcast %cst_31 : f32 to vector<1x64xf32>
      %36 = arith.addf %34, %35 : vector<1x64xf32>
      %37 = math.rsqrt %36 : vector<1x64xf32>
      %38 = arith.mulf %22, %37 : vector<1x64xf32>
      %39 = vector.broadcast %38 : vector<1x64xf32> to vector<16x64xf32>
      %40 = arith.mulf %39, %21 : vector<16x64xf32>
      %41 = arith.mulf %38, %27 : vector<1x64xf32>
      %42 = arith.subf %23, %41 : vector<1x64xf32>
      %43 = vector.broadcast %42 : vector<1x64xf32> to vector<16x64xf32>
      %44 = arith.addf %40, %43 : vector<16x64xf32>
      %cst_32 = arith.constant 0.000000e+00 : f32
      %45 = vector.broadcast %cst_32 : f32 to vector<16x64xf32>
      %46 = arith.cmpf oge, %44, %45 : vector<16x64xf32>
      %cst_33 = arith.constant 0.00999999977 : f32
      %47 = vector.broadcast %cst_33 : f32 to vector<16x64xf32>
      %48 = arith.mulf %47, %44 : vector<16x64xf32>
      %49 = arith.select %46, %44, %48 : vector<16x64xi1>, vector<16x64xf32>
      %c0_34 = arith.constant 0 : index
      %c0_35 = arith.constant 0 : index
      %50 = vector.load %arg8[%c0_34, %c0_35] : memref<64x64xf32, #tpu.memory_space<vmem>>, vector<64x64xf32>
      %cst_36 = arith.constant dense<0.000000e+00> : vector<16x64xf32>
      %51 = tpu.matmul %49, %50, %cst_36 {dimension_numbers = #tpu.dot_dimension_numbers<[1], [0], [0], [1], [0, 0, 1, 1], [], []>} : vector<16x64xf32>, vector<64x64xf32>, vector<16x64xf32> -> vector<16x64xf32>
      %c0_37 = arith.constant 0 : index
      %c0_38 = arith.constant 0 : index
      %52 = vector.load %arg9[%c0_37, %c0_38] : memref<1x64xf32, #tpu.memory_space<vmem>>, vector<1x64xf32>
      %53 = vector.broadcast %52 : vector<1x64xf32> to vector<16x64xf32>
      %54 = arith.addf %51, %53 : vector<16x64xf32>
      %c0_39 = arith.constant 0 : index
      %c0_40 = arith.constant 0 : index
      %55 = vector.load %arg10[%c0_39, %c0_40] : memref<1x64xf32, #tpu.memory_space<vmem>>, vector<1x64xf32>
      %c0_41 = arith.constant 0 : index
      %c0_42 = arith.constant 0 : index
      %56 = vector.load %arg11[%c0_41, %c0_42] : memref<1x64xf32, #tpu.memory_space<vmem>>, vector<1x64xf32>
      %cst_43 = arith.constant dense<0.000000e+00> : vector<64xf32>
      %57 = vector.multi_reduction <add>, %54, %cst_43 [0] : vector<16x64xf32> to vector<64xf32>
      %58 = vector.shape_cast %57 : vector<64xf32> to vector<1x64xf32>
      %cst_44 = arith.constant 1.600000e+01 : f32
      %59 = vector.broadcast %cst_44 : f32 to vector<1x64xf32>
      %60 = arith.divf %58, %59 : vector<1x64xf32>
      %61 = vector.broadcast %60 : vector<1x64xf32> to vector<16x64xf32>
      %62 = arith.subf %54, %61 : vector<16x64xf32>
      %63 = arith.mulf %62, %62 : vector<16x64xf32>
      %cst_45 = arith.constant dense<0.000000e+00> : vector<64xf32>
      %64 = vector.multi_reduction <add>, %63, %cst_45 [0] : vector<16x64xf32> to vector<64xf32>
      %65 = vector.shape_cast %64 : vector<64xf32> to vector<1x64xf32>
      %cst_46 = arith.constant 1.600000e+01 : f32
      %66 = vector.broadcast %cst_46 : f32 to vector<1x64xf32>
      %67 = arith.divf %65, %66 : vector<1x64xf32>
      %cst_47 = arith.constant 9.99999974E-6 : f32
      %68 = vector.broadcast %cst_47 : f32 to vector<1x64xf32>
      %69 = arith.addf %67, %68 : vector<1x64xf32>
      %70 = math.rsqrt %69 : vector<1x64xf32>
      %71 = arith.mulf %55, %70 : vector<1x64xf32>
      %72 = vector.broadcast %71 : vector<1x64xf32> to vector<16x64xf32>
      %73 = arith.mulf %72, %54 : vector<16x64xf32>
      %74 = arith.mulf %71, %60 : vector<1x64xf32>
      %75 = arith.subf %56, %74 : vector<1x64xf32>
      %76 = vector.broadcast %75 : vector<1x64xf32> to vector<16x64xf32>
      %77 = arith.addf %73, %76 : vector<16x64xf32>
      %cst_48 = arith.constant 0.000000e+00 : f32
      %78 = vector.broadcast %cst_48 : f32 to vector<16x64xf32>
      %79 = arith.cmpf oge, %77, %78 : vector<16x64xf32>
      %cst_49 = arith.constant 0.00999999977 : f32
      %80 = vector.broadcast %cst_49 : f32 to vector<16x64xf32>
      %81 = arith.mulf %80, %77 : vector<16x64xf32>
      %82 = arith.select %79, %77, %81 : vector<16x64xi1>, vector<16x64xf32>
      %c0_50 = arith.constant 0 : index
      %c0_51 = arith.constant 0 : index
      %83 = vector.load %arg12[%c0_50, %c0_51] : memref<64x16xf32, #tpu.memory_space<vmem>>, vector<64x16xf32>
      %cst_52 = arith.constant dense<0.000000e+00> : vector<16x16xf32>
      %84 = tpu.matmul %82, %83, %cst_52 {dimension_numbers = #tpu.dot_dimension_numbers<[1], [0], [0], [1], [0, 0, 1, 1], [], []>} : vector<16x64xf32>, vector<64x16xf32>, vector<16x16xf32> -> vector<16x16xf32>
      %c0_53 = arith.constant 0 : index
      %c0_54 = arith.constant 0 : index
      %85 = vector.load %arg13[%c0_53, %c0_54] : memref<1x16xf32, #tpu.memory_space<vmem>>, vector<1x16xf32>
      %86 = vector.broadcast %85 : vector<1x16xf32> to vector<16x16xf32>
      %87 = arith.addf %84, %86 : vector<16x16xf32>
      %cst_55 = arith.constant dense<0xFF800000> : vector<16xf32>
      %88 = vector.multi_reduction <maximumf>, %87, %cst_55 [1] : vector<16x16xf32> to vector<16xf32>
      %89 = vector.shape_cast %88 : vector<16xf32> to vector<16x1xf32>
      %90 = vector.broadcast %89 : vector<16x1xf32> to vector<16x16xf32>
      %91 = arith.subf %87, %90 : vector<16x16xf32>
      %92 = math.exp %91 : vector<16x16xf32>
      %cst_56 = arith.constant dense<0.000000e+00> : vector<16xf32>
      %93 = vector.multi_reduction <add>, %92, %cst_56 [1] : vector<16x16xf32> to vector<16xf32>
      %94 = vector.shape_cast %93 : vector<16xf32> to vector<16x1xf32>
      %95 = tpu.reciprocal %94 {approx = true} : vector<16x1xf32> -> vector<16x1xf32>
      %96 = vector.broadcast %95 : vector<16x1xf32> to vector<16x16xf32>
      %97 = arith.mulf %92, %96 : vector<16x16xf32>
      %c0_57 = arith.constant 0 : index
      %c0_58 = arith.constant 0 : index
      %98 = vector.load %arg23[%c0_57, %c0_58] : memref<16x32xf32, #tpu.memory_space<vmem>>, vector<16x32xf32>
      %cst_59 = arith.constant dense<0.000000e+00> : vector<16x32xf32>
      %99 = tpu.matmul %97, %98, %cst_59 {dimension_numbers = #tpu.dot_dimension_numbers<[1], [0], [0], [1], [0, 0, 1, 1], [], []>} : vector<16x16xf32>, vector<16x32xf32>, vector<16x32xf32> -> vector<16x32xf32>
      %cst_60 = arith.constant 0.000000e+00 : f32
      %100 = vector.broadcast %cst_60 : f32 to vector<16x32xf32>
      %101 = arith.cmpf oge, %99, %100 : vector<16x32xf32>
      %cst_61 = arith.constant 0.00999999977 : f32
      %102 = vector.broadcast %cst_61 : f32 to vector<16x32xf32>
      %103 = arith.mulf %102, %99 : vector<16x32xf32>
      %104 = arith.select %101, %99, %103 : vector<16x32xi1>, vector<16x32xf32>
      %c0_62 = arith.constant 0 : index
      %c0_63 = arith.constant 0 : index
      %105 = vector.load %arg27[%c0_62, %c0_63] : memref<16x64xf32, #tpu.memory_space<vmem>>, vector<16x64xf32>
      %c0_64 = arith.constant 0 : index
      %c0_65 = arith.constant 0 : index
      %106 = vector.load %arg14[%c0_64, %c0_65] : memref<1x64xf32, #tpu.memory_space<vmem>>, vector<1x64xf32>
      %107 = vector.broadcast %106 : vector<1x64xf32> to vector<16x64xf32>
      %108 = arith.addf %105, %107 : vector<16x64xf32>
      %c0_66 = arith.constant 0 : index
      %c0_67 = arith.constant 0 : index
      %109 = vector.load %arg15[%c0_66, %c0_67] : memref<1x64xf32, #tpu.memory_space<vmem>>, vector<1x64xf32>
      %c0_68 = arith.constant 0 : index
      %c0_69 = arith.constant 0 : index
      %110 = vector.load %arg16[%c0_68, %c0_69] : memref<1x64xf32, #tpu.memory_space<vmem>>, vector<1x64xf32>
      %cst_70 = arith.constant dense<0.000000e+00> : vector<64xf32>
      %111 = vector.multi_reduction <add>, %108, %cst_70 [0] : vector<16x64xf32> to vector<64xf32>
      %112 = vector.shape_cast %111 : vector<64xf32> to vector<1x64xf32>
      %cst_71 = arith.constant 1.600000e+01 : f32
      %113 = vector.broadcast %cst_71 : f32 to vector<1x64xf32>
      %114 = arith.divf %112, %113 : vector<1x64xf32>
      %115 = vector.broadcast %114 : vector<1x64xf32> to vector<16x64xf32>
      %116 = arith.subf %108, %115 : vector<16x64xf32>
      %117 = arith.mulf %116, %116 : vector<16x64xf32>
      %cst_72 = arith.constant dense<0.000000e+00> : vector<64xf32>
      %118 = vector.multi_reduction <add>, %117, %cst_72 [0] : vector<16x64xf32> to vector<64xf32>
      %119 = vector.shape_cast %118 : vector<64xf32> to vector<1x64xf32>
      %cst_73 = arith.constant 1.600000e+01 : f32
      %120 = vector.broadcast %cst_73 : f32 to vector<1x64xf32>
      %121 = arith.divf %119, %120 : vector<1x64xf32>
      %cst_74 = arith.constant 9.99999974E-6 : f32
      %122 = vector.broadcast %cst_74 : f32 to vector<1x64xf32>
      %123 = arith.addf %121, %122 : vector<1x64xf32>
      %124 = math.rsqrt %123 : vector<1x64xf32>
      %125 = arith.mulf %109, %124 : vector<1x64xf32>
      %126 = vector.broadcast %125 : vector<1x64xf32> to vector<16x64xf32>
      %127 = arith.mulf %126, %108 : vector<16x64xf32>
      %128 = arith.mulf %125, %114 : vector<1x64xf32>
      %129 = arith.subf %110, %128 : vector<1x64xf32>
      %130 = vector.broadcast %129 : vector<1x64xf32> to vector<16x64xf32>
      %131 = arith.addf %127, %130 : vector<16x64xf32>
      %cst_75 = arith.constant 0.000000e+00 : f32
      %132 = vector.broadcast %cst_75 : f32 to vector<16x64xf32>
      %133 = arith.cmpf oge, %131, %132 : vector<16x64xf32>
      %cst_76 = arith.constant 0.00999999977 : f32
      %134 = vector.broadcast %cst_76 : f32 to vector<16x64xf32>
      %135 = arith.mulf %134, %131 : vector<16x64xf32>
      %136 = arith.select %133, %131, %135 : vector<16x64xi1>, vector<16x64xf32>
      %c0_77 = arith.constant 0 : index
      %c0_78 = arith.constant 0 : index
      %137 = vector.load %arg17[%c0_77, %c0_78] : memref<64x64xf32, #tpu.memory_space<vmem>>, vector<64x64xf32>
      %cst_79 = arith.constant dense<0.000000e+00> : vector<16x64xf32>
      %138 = tpu.matmul %136, %137, %cst_79 {dimension_numbers = #tpu.dot_dimension_numbers<[1], [0], [0], [1], [0, 0, 1, 1], [], []>} : vector<16x64xf32>, vector<64x64xf32>, vector<16x64xf32> -> vector<16x64xf32>
      %c0_80 = arith.constant 0 : index
      %c0_81 = arith.constant 0 : index
      %139 = vector.load %arg18[%c0_80, %c0_81] : memref<1x64xf32, #tpu.memory_space<vmem>>, vector<1x64xf32>
      %140 = vector.broadcast %139 : vector<1x64xf32> to vector<16x64xf32>
      %141 = arith.addf %138, %140 : vector<16x64xf32>
      %c0_82 = arith.constant 0 : index
      %c0_83 = arith.constant 0 : index
      %142 = vector.load %arg19[%c0_82, %c0_83] : memref<1x64xf32, #tpu.memory_space<vmem>>, vector<1x64xf32>
      %c0_84 = arith.constant 0 : index
      %c0_85 = arith.constant 0 : index
      %143 = vector.load %arg20[%c0_84, %c0_85] : memref<1x64xf32, #tpu.memory_space<vmem>>, vector<1x64xf32>
      %cst_86 = arith.constant dense<0.000000e+00> : vector<64xf32>
      %144 = vector.multi_reduction <add>, %141, %cst_86 [0] : vector<16x64xf32> to vector<64xf32>
      %145 = vector.shape_cast %144 : vector<64xf32> to vector<1x64xf32>
      %cst_87 = arith.constant 1.600000e+01 : f32
      %146 = vector.broadcast %cst_87 : f32 to vector<1x64xf32>
      %147 = arith.divf %145, %146 : vector<1x64xf32>
      %148 = vector.broadcast %147 : vector<1x64xf32> to vector<16x64xf32>
      %149 = arith.subf %141, %148 : vector<16x64xf32>
      %150 = arith.mulf %149, %149 : vector<16x64xf32>
      %cst_88 = arith.constant dense<0.000000e+00> : vector<64xf32>
      %151 = vector.multi_reduction <add>, %150, %cst_88 [0] : vector<16x64xf32> to vector<64xf32>
      %152 = vector.shape_cast %151 : vector<64xf32> to vector<1x64xf32>
      %cst_89 = arith.constant 1.600000e+01 : f32
      %153 = vector.broadcast %cst_89 : f32 to vector<1x64xf32>
      %154 = arith.divf %152, %153 : vector<1x64xf32>
      %cst_90 = arith.constant 9.99999974E-6 : f32
      %155 = vector.broadcast %cst_90 : f32 to vector<1x64xf32>
      %156 = arith.addf %154, %155 : vector<1x64xf32>
      %157 = math.rsqrt %156 : vector<1x64xf32>
      %158 = arith.mulf %142, %157 : vector<1x64xf32>
      %159 = vector.broadcast %158 : vector<1x64xf32> to vector<16x64xf32>
      %160 = arith.mulf %159, %141 : vector<16x64xf32>
      %161 = arith.mulf %158, %147 : vector<1x64xf32>
      %162 = arith.subf %143, %161 : vector<1x64xf32>
      %163 = vector.broadcast %162 : vector<1x64xf32> to vector<16x64xf32>
      %164 = arith.addf %160, %163 : vector<16x64xf32>
      %cst_91 = arith.constant 0.000000e+00 : f32
      %165 = vector.broadcast %cst_91 : f32 to vector<16x64xf32>
      %166 = arith.cmpf oge, %164, %165 : vector<16x64xf32>
      %cst_92 = arith.constant 0.00999999977 : f32
      %167 = vector.broadcast %cst_92 : f32 to vector<16x64xf32>
      %168 = arith.mulf %167, %164 : vector<16x64xf32>
      %169 = arith.select %166, %164, %168 : vector<16x64xi1>, vector<16x64xf32>
      %c0_93 = arith.constant 0 : index
      %c0_94 = arith.constant 0 : index
      %170 = vector.load %arg21[%c0_93, %c0_94] : memref<64x16xf32, #tpu.memory_space<vmem>>, vector<64x16xf32>
      %cst_95 = arith.constant dense<0.000000e+00> : vector<16x16xf32>
      %171 = tpu.matmul %169, %170, %cst_95 {dimension_numbers = #tpu.dot_dimension_numbers<[1], [0], [0], [1], [0, 0, 1, 1], [], []>} : vector<16x64xf32>, vector<64x16xf32>, vector<16x16xf32> -> vector<16x16xf32>
      %c0_96 = arith.constant 0 : index
      %c0_97 = arith.constant 0 : index
      %172 = vector.load %arg22[%c0_96, %c0_97] : memref<1x16xf32, #tpu.memory_space<vmem>>, vector<1x16xf32>
      %173 = vector.broadcast %172 : vector<1x16xf32> to vector<16x16xf32>
      %174 = arith.addf %171, %173 : vector<16x16xf32>
      %cst_98 = arith.constant dense<0xFF800000> : vector<16xf32>
      %175 = vector.multi_reduction <maximumf>, %174, %cst_98 [1] : vector<16x16xf32> to vector<16xf32>
      %176 = vector.shape_cast %175 : vector<16xf32> to vector<16x1xf32>
      %177 = vector.broadcast %176 : vector<16x1xf32> to vector<16x16xf32>
      %178 = arith.subf %174, %177 : vector<16x16xf32>
      %179 = math.exp %178 : vector<16x16xf32>
      %cst_99 = arith.constant dense<0.000000e+00> : vector<16xf32>
      %180 = vector.multi_reduction <add>, %179, %cst_99 [1] : vector<16x16xf32> to vector<16xf32>
      %181 = vector.shape_cast %180 : vector<16xf32> to vector<16x1xf32>
      %182 = tpu.reciprocal %181 {approx = true} : vector<16x1xf32> -> vector<16x1xf32>
      %183 = vector.broadcast %182 : vector<16x1xf32> to vector<16x16xf32>
      %184 = arith.mulf %179, %183 : vector<16x16xf32>
      %c0_100 = arith.constant 0 : index
      %c0_101 = arith.constant 0 : index
      %185 = vector.load %arg24[%c0_100, %c0_101] : memref<16x32xf32, #tpu.memory_space<vmem>>, vector<16x32xf32>
      %cst_102 = arith.constant dense<0.000000e+00> : vector<16x32xf32>
      %186 = tpu.matmul %184, %185, %cst_102 {dimension_numbers = #tpu.dot_dimension_numbers<[1], [0], [0], [1], [0, 0, 1, 1], [], []>} : vector<16x16xf32>, vector<16x32xf32>, vector<16x32xf32> -> vector<16x32xf32>
      %cst_103 = arith.constant 0.000000e+00 : f32
      %187 = vector.broadcast %cst_103 : f32 to vector<16x32xf32>
      %188 = arith.cmpf oge, %186, %187 : vector<16x32xf32>
      %cst_104 = arith.constant 0.00999999977 : f32
      %189 = vector.broadcast %cst_104 : f32 to vector<16x32xf32>
      %190 = arith.mulf %189, %186 : vector<16x32xf32>
      %191 = arith.select %188, %186, %190 : vector<16x32xi1>, vector<16x32xf32>
      %192 = arith.addf %104, %191 : vector<16x32xf32>
      %cst_105 = arith.constant 3.000000e+00 : f32
      %193 = vector.broadcast %cst_105 : f32 to vector<16x32xf32>
      %194 = arith.mulf %193, %192 : vector<16x32xf32>
      %c0_106 = arith.constant 0 : index
      %c0_107 = arith.constant 0 : index
      %195 = vector.load %arg25[%c0_106, %c0_107] : memref<16x32xf32, #tpu.memory_space<vmem>>, vector<16x32xf32>
      tpu.vector_store %arg25[%c0_106, %c0_107], %194 {strides = array<i32>} : memref<16x32xf32, #tpu.memory_space<vmem>>, vector<16x32xf32>,
    } else {
    }
    return
  }
  func.func @transform_0(%arg0: i32) -> (i32, i32) {
    %c0_i32 = arith.constant 0 : i32
    %c0_i32_0 = arith.constant 0 : i32
    return %arg0, %c0_i32 : i32, i32
  }
  func.func @transform_1(%arg0: i32) -> (i32, i32) {
    %c0_i32 = arith.constant 0 : i32
    %c0_i32_0 = arith.constant 0 : i32
    return %arg0, %c0_i32 : i32, i32
  }
  func.func @transform_2(%arg0: i32) -> (i32, i32) {
    %c0_i32 = arith.constant 0 : i32
    %c0_i32_0 = arith.constant 0 : i32
    return %arg0, %c0_i32 : i32, i32
  }
  func.func @transform_3(%arg0: i32) -> (i32, i32) {
    %c0_i32 = arith.constant 0 : i32
    %c0_i32_0 = arith.constant 0 : i32
    return %arg0, %c0_i32 : i32, i32
  }
  func.func @transform_4(%arg0: i32) -> (i32, i32) {
    %c0_i32 = arith.constant 0 : i32
    %c0_i32_0 = arith.constant 0 : i32
    %c0_i32_1 = arith.constant 0 : i32
    return %c0_i32, %c0_i32_0 : i32, i32
  }
  func.func @transform_5(%arg0: i32) -> (i32, i32) {
    %c0_i32 = arith.constant 0 : i32
    %c0_i32_0 = arith.constant 0 : i32
    %c0_i32_1 = arith.constant 0 : i32
    return %c0_i32, %c0_i32_0 : i32, i32
  }
  func.func @transform_6(%arg0: i32) -> (i32, i32) {
    %c0_i32 = arith.constant 0 : i32
    %c0_i32_0 = arith.constant 0 : i32
    %c0_i32_1 = arith.constant 0 : i32
    return %c0_i32, %c0_i32_0 : i32, i32
  }
  func.func @transform_7(%arg0: i32) -> (i32, i32) {
    %c0_i32 = arith.constant 0 : i32
    %c0_i32_0 = arith.constant 0 : i32
    %c0_i32_1 = arith.constant 0 : i32
    return %c0_i32, %c0_i32_0 : i32, i32
  }
  func.func @transform_8(%arg0: i32) -> (i32, i32) {
    %c0_i32 = arith.constant 0 : i32
    %c0_i32_0 = arith.constant 0 : i32
    %c0_i32_1 = arith.constant 0 : i32
    return %c0_i32, %c0_i32_0 : i32, i32
  }
  func.func @transform_9(%arg0: i32) -> (i32, i32) {
    %c0_i32 = arith.constant 0 : i32
    %c0_i32_0 = arith.constant 0 : i32
    %c0_i32_1 = arith.constant 0 : i32
    return %c0_i32, %c0_i32_0 : i32, i32
  }
  func.func @transform_10(%arg0: i32) -> (i32, i32) {
    %c0_i32 = arith.constant 0 : i32
    %c0_i32_0 = arith.constant 0 : i32
    %c0_i32_1 = arith.constant 0 : i32
    return %c0_i32, %c0_i32_0 : i32, i32
  }
  func.func @transform_11(%arg0: i32) -> (i32, i32) {
    %c0_i32 = arith.constant 0 : i32
    %c0_i32_0 = arith.constant 0 : i32
    %c0_i32_1 = arith.constant 0 : i32
    return %c0_i32, %c0_i32_0 : i32, i32
  }
  func.func @transform_12(%arg0: i32) -> (i32, i32) {
    %c0_i32 = arith.constant 0 : i32
    %c0_i32_0 = arith.constant 0 : i32
    %c0_i32_1 = arith.constant 0 : i32
    return %c0_i32, %c0_i32_0 : i32, i32
  }
  func.func @transform_13(%arg0: i32) -> (i32, i32) {
    %c0_i32 = arith.constant 0 : i32
    %c0_i32_0 = arith.constant 0 : i32
    %c0_i32_1 = arith.constant 0 : i32
    return %c0_i32, %c0_i32_0 : i32, i32
  }
  func.func @transform_14(%arg0: i32) -> (i32, i32) {
    %c0_i32 = arith.constant 0 : i32
    %c0_i32_0 = arith.constant 0 : i32
    %c0_i32_1 = arith.constant 0 : i32
    return %c0_i32, %c0_i32_0 : i32, i32
  }
  func.func @transform_15(%arg0: i32) -> (i32, i32) {
    %c0_i32 = arith.constant 0 : i32
    %c0_i32_0 = arith.constant 0 : i32
    %c0_i32_1 = arith.constant 0 : i32
    return %c0_i32, %c0_i32_0 : i32, i32
  }
  func.func @transform_16(%arg0: i32) -> (i32, i32) {
    %c0_i32 = arith.constant 0 : i32
    %c0_i32_0 = arith.constant 0 : i32
    %c0_i32_1 = arith.constant 0 : i32
    return %c0_i32, %c0_i32_0 : i32, i32
  }
  func.func @transform_17(%arg0: i32) -> (i32, i32) {
    %c0_i32 = arith.constant 0 : i32
    %c0_i32_0 = arith.constant 0 : i32
    %c0_i32_1 = arith.constant 0 : i32
    return %c0_i32, %c0_i32_0 : i32, i32
  }
  func.func @transform_18(%arg0: i32) -> (i32, i32) {
    %c0_i32 = arith.constant 0 : i32
    %c0_i32_0 = arith.constant 0 : i32
    %c0_i32_1 = arith.constant 0 : i32
    return %c0_i32, %c0_i32_0 : i32, i32
  }
  func.func @transform_19(%arg0: i32) -> (i32, i32) {
    %c0_i32 = arith.constant 0 : i32
    %c0_i32_0 = arith.constant 0 : i32
    %c0_i32_1 = arith.constant 0 : i32
    return %c0_i32, %c0_i32_0 : i32, i32
  }
  func.func @transform_20(%arg0: i32) -> (i32, i32) {
    %c0_i32 = arith.constant 0 : i32
    %c0_i32_0 = arith.constant 0 : i32
    %c0_i32_1 = arith.constant 0 : i32
    return %c0_i32, %c0_i32_0 : i32, i32
  }
  func.func @transform_21(%arg0: i32) -> (i32, i32) {
    %c0_i32 = arith.constant 0 : i32
    %c0_i32_0 = arith.constant 0 : i32
    %c0_i32_1 = arith.constant 0 : i32
    return %c0_i32, %c0_i32_0 : i32, i32
  }
  func.func @transform_22(%arg0: i32) -> (i32, i32) {
    %c0_i32 = arith.constant 0 : i32
    %c0_i32_0 = arith.constant 0 : i32
    %c0_i32_1 = arith.constant 0 : i32
    return %c0_i32, %c0_i32_0 : i32, i32
  }
  func.func @transform_23(%arg0: i32) -> (i32, i32) {
    %c0_i32 = arith.constant 0 : i32
    %c0_i32_0 = arith.constant 0 : i32
    %c0_i32_1 = arith.constant 0 : i32
    return %c0_i32, %c0_i32_0 : i32, i32
  }
  func.func @transform_24(%arg0: i32) -> (i32, i32) {
    %c0_i32 = arith.constant 0 : i32
    %c0_i32_0 = arith.constant 0 : i32
    %c0_i32_1 = arith.constant 0 : i32
    return %c0_i32, %c0_i32_0 : i32, i32
  }
}

</mosaic_0001>

<llo_original>
// kernel: tpu_custom_call.1
$region0: #{tpu_custom_call.1}
  #allocation0 [shape = 'u32[]', space=smem, size = 0x4, offset = 0x4, fixed_abs, tag = 'smem constant byte address 0x4 - core index']
  #allocation1 [shape = 'u32[144,128]{1,0:T(1,128)}', space=vmem, size = 0x12000, scoped, tag = 'internal scratch']
  #allocation2 [shape = 'f32[16,64]{1,0:T(8,128)}', space=vmem, size = 0x2000, scoped, tag = 'scratch operand']
  #allocation3 [shape = 'f32[16,64]{1,0:T(8,128)}', space=vmem, size = 0x2000, scoped, tag = 'scratch operand']
  %s0 = inlined_call_operand.vmem [shape: f32[16,16], index: 0, kind: input, shape index: {}]
  %s1 = inlined_call_operand.hbm [shape: f32[16,16], index: 1, kind: input, shape index: {}]
  %s2 = inlined_call_operand.hbm [shape: f32[16,64], index: 2, kind: input, shape index: {}]
  %s3 = inlined_call_operand.hbm [shape: f32[16,64], index: 3, kind: input, shape index: {}]
  %s4 = inlined_call_operand.vmem [shape: f32[1,64], index: 4, kind: input, shape index: {}]
  %s5 = inlined_call_operand.hbm [shape: f32[1,64], index: 5, kind: input, shape index: {}]
  %s6 = inlined_call_operand.hbm [shape: f32[1,64], index: 6, kind: input, shape index: {}]
  %s7 = inlined_call_operand.vmem [shape: f32[64,64], index: 7, kind: input, shape index: {}]
  %s8 = inlined_call_operand.hbm [shape: f32[1,64], index: 8, kind: input, shape index: {}]
  %s9 = inlined_call_operand.hbm [shape: f32[1,64], index: 9, kind: input, shape index: {}]
  %s10 = inlined_call_operand.hbm [shape: f32[1,64], index: 10, kind: input, shape index: {}]
  %s11 = inlined_call_operand.vmem [shape: f32[64,16], index: 11, kind: input, shape index: {}]
  %s12 = inlined_call_operand.hbm [shape: f32[1,16], index: 12, kind: input, shape index: {}]
  %s13 = inlined_call_operand.hbm [shape: f32[1,64], index: 13, kind: input, shape index: {}]
  %s14 = inlined_call_operand.vmem [shape: f32[1,64], index: 14, kind: input, shape index: {}]
  %s15 = inlined_call_operand.vmem [shape: f32[1,64], index: 15, kind: input, shape index: {}]
  %s16 = inlined_call_operand.vmem [shape: f32[64,64], index: 16, kind: input, shape index: {}]
  %s17 = inlined_call_operand.vmem [shape: f32[1,64], index: 17, kind: input, shape index: {}]
  %s18 = inlined_call_operand.vmem [shape: f32[1,64], index: 18, kind: input, shape index: {}]
  %s19 = inlined_call_operand.vmem [shape: f32[1,64], index: 19, kind: input, shape index: {}]
  %s20 = inlined_call_operand.vmem [shape: f32[64,16], index: 20, kind: input, shape index: {}]
  %s21 = inlined_call_operand.vmem [shape: f32[1,16], index: 21, kind: input, shape index: {}]
  %s22 = inlined_call_operand.vmem [shape: f32[16,32], index: 22, kind: input, shape index: {}]
  %s23 = inlined_call_operand.vmem [shape: f32[16,32], index: 23, kind: input, shape index: {}]
  %s24 = inlined_call_operand.hbm [shape: f32[16,32], index: 24, kind: output, shape index: {}]
  %s25 = sld [smem:[#allocation0]]
  $region154: #{tpu_custom_call.1} parent=0
    _
  %s27 = ssub.s32 1, %s25
  %s28 = scalar_select 0, %s27, %s25
  $region1: #{tpu_custom_call.1} parent=0
    #allocation4 [shape = 'u8[8192]{0}', space=vmem, size = 0x2000, scoped, tag = 'input window, operand 1, single buffered']
    #allocation5 [shape = 's32[1]{0}', space=sflag, size = 0x4, scoped, tag = 'scoped memory for tpu_custom_call.1']
    #allocation6 [shape = 's32[1]{0}', space=sflag, size = 0x4, scoped, tag = 'scoped memory for tpu_custom_call.1']
    #allocation7 [shape = 'u8[8192]{0}', space=vmem, size = 0x2000, scoped, tag = 'input window, operand 2, single buffered']
    #allocation8 [shape = 's32[1]{0}', space=sflag, size = 0x4, scoped, tag = 'scoped memory for tpu_custom_call.1']
    #allocation9 [shape = 'u8[8192]{0}', space=vmem, size = 0x2000, scoped, tag = 'input window, operand 3, single buffered']
    #allocation10 [shape = 'u8[512]{0}', space=vmem, size = 0x400, scoped, tag = 'input window, operand 5, single buffered']
    #allocation11 [shape = 's32[1]{0}', space=sflag, size = 0x4, scoped, tag = 'scoped memory for tpu_custom_call.1']
    #allocation12 [shape = 'u8[512]{0}', space=vmem, size = 0x400, scoped, tag = 'input window, operand 6, single buffered']
    #allocation13 [shape = 'u8[512]{0}', space=vmem, size = 0x400, scoped, tag = 'input window, operand 8, single buffered']
    #allocation14 [shape = 's32[1]{0}', space=sflag, size = 0x4, scoped, tag = 'scoped memory for tpu_custom_call.1']
    #allocation15 [shape = 'u8[512]{0}', space=vmem, size = 0x400, scoped, tag = 'input window, operand 9, single buffered']
    #allocation16 [shape = 'u8[512]{0}', space=vmem, size = 0x400, scoped, tag = 'input window, operand 10, single buffered']
    #allocation17 [shape = 's32[1]{0}', space=sflag, size = 0x4, scoped, tag = 'scoped memory for tpu_custom_call.1']
    #allocation18 [shape = 'u8[512]{0}', space=vmem, size = 0x400, scoped, tag = 'input window, operand 12, single buffered']
    #allocation19 [shape = 'u8[512]{0}', space=vmem, size = 0x400, scoped, tag = 'input window, operand 13, single buffered']
    #allocation20 [shape = 's32[1]{0}', space=sflag, size = 0x4, scoped, tag = 'scoped memory for tpu_custom_call.1']
    #allocation21 [shape = 'u8[8192]{0}', space=vmem, size = 0x2000, scoped, tag = 'output window, operand 0, single buffered']
    %29 = vsyncpa [#allocation5], 0
    %30 = vsyncpa [#allocation8], 0
    %31 = vsyncpa [#allocation11], 0
    %32 = vsyncpa [#allocation14], 0
    %33 = vsyncpa [#allocation17], 0
    %34 = vsyncpa [#allocation20], 0
    %35 = vsyncpa [#allocation6], 0
    // Predicated region
    $region2: #{tpu_custom_call.1} parent=1 // pred_check
      _
    $region3: #{tpu_custom_call.1} parent=1 // pred_check_branch
      %37 = sbr.rel (0) target = $region5
    $region4: #{tpu_custom_call.1} parent=1 // pred_region
      _
    $region5: #{tpu_custom_call.1} parent=1 // pred_fallthru
      _
    // Predicated region
    $region6: #{tpu_custom_call.1} parent=1 // pred_check
      _
    $region7: #{tpu_custom_call.1} parent=1 // pred_check_branch
      %39 = sbr.rel (0) target = $region9
    $region8: #{tpu_custom_call.1} parent=1 // pred_region
      %s41 = ssub.s32 256, 256
      %42 = vsyncadd [#allocation5], %s41
      %s43 = sshll.u32 [#allocation4], 4
      %s44 = int_to_ptr.vmem [resolvable:$true] %s43
      %49 = dma.hbm_to_vmem [thread:$0]  %s1, 256, %s44, [#allocation5], 128, 128, 8
    $region9: #{tpu_custom_call.1} parent=1 // pred_fallthru
      _
    // Predicated region
    $region10: #{tpu_custom_call.1} parent=1 // pred_check
      _
    $region11: #{tpu_custom_call.1} parent=1 // pred_check_branch
      %51 = sbr.rel (0) target = $region13
    $region12: #{tpu_custom_call.1} parent=1 // pred_region
      %s53 = ssub.s32 256, 256
      %54 = vsyncadd [#allocation8], %s53
      %s55 = sshll.u32 [#allocation7], 4
      %s56 = int_to_ptr.vmem [resolvable:$true] %s55
      %61 = dma.hbm_to_vmem [thread:$0]  %s2, 256, %s56, [#allocation8], 128, 128, 8
    $region13: #{tpu_custom_call.1} parent=1 // pred_fallthru
      _
    // Predicated region
    $region14: #{tpu_custom_call.1} parent=1 // pred_check
      _
    $region15: #{tpu_custom_call.1} parent=1 // pred_check_branch
      %63 = sbr.rel (0) target = $region17
    $region16: #{tpu_custom_call.1} parent=1 // pred_region
      %s65 = ssub.s32 256, 256
      %66 = vsyncadd [#allocation8], %s65
      %s67 = sshll.u32 [#allocation9], 4
      %s68 = int_to_ptr.vmem [resolvable:$true] %s67
      %73 = dma.hbm_to_vmem [thread:$0]  %s3, 256, %s68, [#allocation8], 128, 128, 8
    $region17: #{tpu_custom_call.1} parent=1 // pred_fallthru
      _
    // Predicated region
    $region18: #{tpu_custom_call.1} parent=1 // pred_check
      _
    $region19: #{tpu_custom_call.1} parent=1 // pred_check_branch
      %75 = sbr.rel (0) target = $region21
    $region20: #{tpu_custom_call.1} parent=1 // pred_region
      _
    $region21: #{tpu_custom_call.1} parent=1 // pred_fallthru
      _
    // Predicated region
    $region22: #{tpu_custom_call.1} parent=1 // pred_check
      _
    $region23: #{tpu_custom_call.1} parent=1 // pred_check_branch
      %77 = sbr.rel (0) target = $region25
    $region24: #{tpu_custom_call.1} parent=1 // pred_region
      %s79 = ssub.s32 16, 16
      %80 = vsyncadd [#allocation11], %s79
      %s82 = sshll.u32 [#allocation10], 4
      %s83 = int_to_ptr.vmem [resolvable:$true] %s82
      %85 = dma.hbm_to_vmem [thread:$0]  %s5, 16, %s83, [#allocation11]
    $region25: #{tpu_custom_call.1} parent=1 // pred_fallthru
      _
    // Predicated region
    $region26: #{tpu_custom_call.1} parent=1 // pred_check
      _
    $region27: #{tpu_custom_call.1} parent=1 // pred_check_branch
      %87 = sbr.rel (0) target = $region29
    $region28: #{tpu_custom_call.1} parent=1 // pred_region
      %s89 = ssub.s32 16, 16
      %90 = vsyncadd [#allocation11], %s89
      %s92 = sshll.u32 [#allocation12], 4
      %s93 = int_to_ptr.vmem [resolvable:$true] %s92
      %95 = dma.hbm_to_vmem [thread:$0]  %s6, 16, %s93, [#allocation11]
    $region29: #{tpu_custom_call.1} parent=1 // pred_fallthru
      _
    // Predicated region
    $region30: #{tpu_custom_call.1} parent=1 // pred_check
      _
    $region31: #{tpu_custom_call.1} parent=1 // pred_check_branch
      %97 = sbr.rel (0) target = $region33
    $region32: #{tpu_custom_call.1} parent=1 // pred_region
      _
    $region33: #{tpu_custom_call.1} parent=1 // pred_fallthru
      _
    // Predicated region
    $region34: #{tpu_custom_call.1} parent=1 // pred_check
      _
    $region35: #{tpu_custom_call.1} parent=1 // pred_check_branch
      %99 = sbr.rel (0) target = $region37
    $region36: #{tpu_custom_call.1} parent=1 // pred_region
      %s101 = ssub.s32 16, 16
      %102 = vsyncadd [#allocation14], %s101
      %s104 = sshll.u32 [#allocation13], 4
      %s105 = int_to_ptr.vmem [resolvable:$true] %s104
      %107 = dma.hbm_to_vmem [thread:$0]  %s8, 16, %s105, [#allocation14]
    $region37: #{tpu_custom_call.1} parent=1 // pred_fallthru
      _
    // Predicated region
    $region38: #{tpu_custom_call.1} parent=1 // pred_check
      _
    $region39: #{tpu_custom_call.1} parent=1 // pred_check_branch
      %109 = sbr.rel (0) target = $region41
    $region40: #{tpu_custom_call.1} parent=1 // pred_region
      %s111 = ssub.s32 16, 16
      %112 = vsyncadd [#allocation14], %s111
      %s114 = sshll.u32 [#allocation15], 4
      %s115 = int_to_ptr.vmem [resolvable:$true] %s114
      %117 = dma.hbm_to_vmem [thread:$0]  %s9, 16, %s115, [#allocation14]
    $region41: #{tpu_custom_call.1} parent=1 // pred_fallthru
      _
    // Predicated region
    $region42: #{tpu_custom_call.1} parent=1 // pred_check
      _
    $region43: #{tpu_custom_call.1} parent=1 // pred_check_branch
      %119 = sbr.rel (0) target = $region45
    $region44: #{tpu_custom_call.1} parent=1 // pred_region
      %s121 = ssub.s32 16, 16
      %122 = vsyncadd [#allocation17], %s121
      %s124 = sshll.u32 [#allocation16], 4
      %s125 = int_to_ptr.vmem [resolvable:$true] %s124
      %127 = dma.hbm_to_vmem [thread:$0]  %s10, 16, %s125, [#allocation17]
    $region45: #{tpu_custom_call.1} parent=1 // pred_fallthru
      _
    // Predicated region
    $region46: #{tpu_custom_call.1} parent=1 // pred_check
      _
    $region47: #{tpu_custom_call.1} parent=1 // pred_check_branch
      %129 = sbr.rel (0) target = $region49
    $region48: #{tpu_custom_call.1} parent=1 // pred_region
      _
    $region49: #{tpu_custom_call.1} parent=1 // pred_fallthru
      _
    // Predicated region
    $region50: #{tpu_custom_call.1} parent=1 // pred_check
      _
    $region51: #{tpu_custom_call.1} parent=1 // pred_check_branch
      %131 = sbr.rel (0) target = $region53
    $region52: #{tpu_custom_call.1} parent=1 // pred_region
      %s133 = ssub.s32 16, 16
      %134 = vsyncadd [#allocation17], %s133
      %s136 = sshll.u32 [#allocation18], 4
      %s137 = int_to_ptr.vmem [resolvable:$true] %s136
      %139 = dma.hbm_to_vmem [thread:$0]  %s12, 16, %s137, [#allocation17]
    $region53: #{tpu_custom_call.1} parent=1 // pred_fallthru
      _
    // Predicated region
    $region54: #{tpu_custom_call.1} parent=1 // pred_check
      _
    $region55: #{tpu_custom_call.1} parent=1 // pred_check_branch
      %141 = sbr.rel (0) target = $region57
    $region56: #{tpu_custom_call.1} parent=1 // pred_region
      %s143 = ssub.s32 16, 16
      %144 = vsyncadd [#allocation20], %s143
      %s146 = sshll.u32 [#allocation19], 4
      %s147 = int_to_ptr.vmem [resolvable:$true] %s146
      %149 = dma.hbm_to_vmem [thread:$0]  %s13, 16, %s147, [#allocation20]
    $region57: #{tpu_custom_call.1} parent=1 // pred_fallthru
      _
    // Predicated region
    $region58: #{tpu_custom_call.1} parent=1 // pred_check
      _
    $region59: #{tpu_custom_call.1} parent=1 // pred_check_branch
      %151 = sbr.rel (0) target = $region61
    $region60: #{tpu_custom_call.1} parent=1 // pred_region
      _
    $region61: #{tpu_custom_call.1} parent=1 // pred_fallthru
      _
    // Predicated region
    $region62: #{tpu_custom_call.1} parent=1 // pred_check
      _
    $region63: #{tpu_custom_call.1} parent=1 // pred_check_branch
      %153 = sbr.rel (0) target = $region65
    $region64: #{tpu_custom_call.1} parent=1 // pred_region
      _
    $region65: #{tpu_custom_call.1} parent=1 // pred_fallthru
      _
    // Predicated region
    $region66: #{tpu_custom_call.1} parent=1 // pred_check
      _
    $region67: #{tpu_custom_call.1} parent=1 // pred_check_branch
      %155 = sbr.rel (0) target = $region69
    $region68: #{tpu_custom_call.1} parent=1 // pred_region
      _
    $region69: #{tpu_custom_call.1} parent=1 // pred_fallthru
      _
    // Predicated region
    $region70: #{tpu_custom_call.1} parent=1 // pred_check
      _
    $region71: #{tpu_custom_call.1} parent=1 // pred_check_branch
      %157 = sbr.rel (0) target = $region73
    $region72: #{tpu_custom_call.1} parent=1 // pred_region
      _
    $region73: #{tpu_custom_call.1} parent=1 // pred_fallthru
      _
    // Predicated region
    $region74: #{tpu_custom_call.1} parent=1 // pred_check
      _
    $region75: #{tpu_custom_call.1} parent=1 // pred_check_branch
      %159 = sbr.rel (0) target = $region77
    $region76: #{tpu_custom_call.1} parent=1 // pred_region
      _
    $region77: #{tpu_custom_call.1} parent=1 // pred_fallthru
      _
    // Predicated region
    $region78: #{tpu_custom_call.1} parent=1 // pred_check
      _
    $region79: #{tpu_custom_call.1} parent=1 // pred_check_branch
      %161 = sbr.rel (0) target = $region81
    $region80: #{tpu_custom_call.1} parent=1 // pred_region
      _
    $region81: #{tpu_custom_call.1} parent=1 // pred_fallthru
      _
    // Predicated region
    $region82: #{tpu_custom_call.1} parent=1 // pred_check
      _
    $region83: #{tpu_custom_call.1} parent=1 // pred_check_branch
      %163 = sbr.rel (0) target = $region85
    $region84: #{tpu_custom_call.1} parent=1 // pred_region
      _
    $region85: #{tpu_custom_call.1} parent=1 // pred_fallthru
      _
    // Predicated region
    $region86: #{tpu_custom_call.1} parent=1 // pred_check
      _
    $region87: #{tpu_custom_call.1} parent=1 // pred_check_branch
      %165 = sbr.rel (0) target = $region89
    $region88: #{tpu_custom_call.1} parent=1 // pred_region
      _
    $region89: #{tpu_custom_call.1} parent=1 // pred_fallthru
      _
    // Predicated region
    $region90: #{tpu_custom_call.1} parent=1 // pred_check
      _
    $region91: #{tpu_custom_call.1} parent=1 // pred_check_branch
      %167 = sbr.rel (0) target = $region93
    $region92: #{tpu_custom_call.1} parent=1 // pred_region
      _
    $region93: #{tpu_custom_call.1} parent=1 // pred_fallthru
      _
    // Predicated region
    $region94: #{tpu_custom_call.1} parent=1 // pred_check
      _
    $region95: #{tpu_custom_call.1} parent=1 // pred_check_branch
      %169 = sbr.rel (0) target = $region97
    $region96: #{tpu_custom_call.1} parent=1 // pred_region
      _
    $region97: #{tpu_custom_call.1} parent=1 // pred_fallthru
      _
    // Predicated region
    $region98: #{tpu_custom_call.1} parent=1 // pred_check
      _
    $region99: #{tpu_custom_call.1} parent=1 // pred_check_branch
      %171 = sbr.rel (0) target = $region101
    $region100: #{tpu_custom_call.1} parent=1 // pred_region
      %172 = dma.done [#allocation5], 256
    $region101: #{tpu_custom_call.1} parent=1 // pred_fallthru
      _
    // Predicated region
    $region102: #{tpu_custom_call.1} parent=1 // pred_check
      _
    $region103: #{tpu_custom_call.1} parent=1 // pred_check_branch
      %174 = sbr.rel (0) target = $region105
    $region104: #{tpu_custom_call.1} parent=1 // pred_region
      %175 = dma.done [#allocation8], 256
    $region105: #{tpu_custom_call.1} parent=1 // pred_fallthru
      _
    // Predicated region
    $region106: #{tpu_custom_call.1} parent=1 // pred_check
      _
    $region107: #{tpu_custom_call.1} parent=1 // pred_check_branch
      %177 = sbr.rel (0) target = $region109
    $region108: #{tpu_custom_call.1} parent=1 // pred_region
      %178 = dma.done [#allocation8], 256
    $region109: #{tpu_custom_call.1} parent=1 // pred_fallthru
      _
    // Predicated region
    $region110: #{tpu_custom_call.1} parent=1 // pred_check
      _
    $region111: #{tpu_custom_call.1} parent=1 // pred_check_branch
      %180 = sbr.rel (0) target = $region113
    $region112: #{tpu_custom_call.1} parent=1 // pred_region
      %181 = dma.done [#allocation11], 16
    $region113: #{tpu_custom_call.1} parent=1 // pred_fallthru
      _
    // Predicated region
    $region114: #{tpu_custom_call.1} parent=1 // pred_check
      _
    $region115: #{tpu_custom_call.1} parent=1 // pred_check_branch
      %183 = sbr.rel (0) target = $region117
    $region116: #{tpu_custom_call.1} parent=1 // pred_region
      %184 = dma.done [#allocation11], 16
    $region117: #{tpu_custom_call.1} parent=1 // pred_fallthru
      _
    // Predicated region
    $region118: #{tpu_custom_call.1} parent=1 // pred_check
      _
    $region119: #{tpu_custom_call.1} parent=1 // pred_check_branch
      %186 = sbr.rel (0) target = $region121
    $region120: #{tpu_custom_call.1} parent=1 // pred_region
      %187 = dma.done [#allocation14], 16
    $region121: #{tpu_custom_call.1} parent=1 // pred_fallthru
      _
    // Predicated region
    $region122: #{tpu_custom_call.1} parent=1 // pred_check
      _
    $region123: #{tpu_custom_call.1} parent=1 // pred_check_branch
      %189 = sbr.rel (0) target = $region125
    $region124: #{tpu_custom_call.1} parent=1 // pred_region
      %190 = dma.done [#allocation14], 16
    $region125: #{tpu_custom_call.1} parent=1 // pred_fallthru
      _
    // Predicated region
    $region126: #{tpu_custom_call.1} parent=1 // pred_check
      _
    $region127: #{tpu_custom_call.1} parent=1 // pred_check_branch
      %192 = sbr.rel (0) target = $region129
    $region128: #{tpu_custom_call.1} parent=1 // pred_region
      %193 = dma.done [#allocation17], 16
    $region129: #{tpu_custom_call.1} parent=1 // pred_fallthru
      _
    // Predicated region
    $region130: #{tpu_custom_call.1} parent=1 // pred_check
      _
    $region131: #{tpu_custom_call.1} parent=1 // pred_check_branch
      %195 = sbr.rel (0) target = $region133
    $region132: #{tpu_custom_call.1} parent=1 // pred_region
      %196 = dma.done [#allocation17], 16
    $region133: #{tpu_custom_call.1} parent=1 // pred_fallthru
      _
    // Predicated region
    $region134: #{tpu_custom_call.1} parent=1 // pred_check
      _
    $region135: #{tpu_custom_call.1} parent=1 // pred_check_branch
      %198 = sbr.rel (0) target = $region137
    $region136: #{tpu_custom_call.1} parent=1 // pred_region
      %199 = dma.done [#allocation20], 16
    $region137: #{tpu_custom_call.1} parent=1 // pred_fallthru
      _
    %p200 = scmp.eq.s32.totalorder 0, 0
    // Predicated region
    $region138: #{tpu_custom_call.1} parent=1 // pred_check
      %p201 = pneg %p200
    $region139: #{tpu_custom_call.1} parent=1 // pred_check_branch
      %203 = sbr.rel (%p201) target = $region141
    $region140: #{tpu_custom_call.1} parent=1 // pred_region
      %vm204 = vcmask 523264
      %205 = vst.msk [vmem:[#allocation2] sm:$0xff] %vm204, 0.0
      %206 = vst.msk [vmem:[#allocation2 + $0x8] sm:$0xff] %vm204, 0.0
      %207 = vst.msk [vmem:[#allocation3] sm:$0xff] %vm204, 0.0
      %208 = vst.msk [vmem:[#allocation3 + $0x8] sm:$0xff] %vm204, 0.0
    $region141: #{tpu_custom_call.1} parent=1 // pred_fallthru
      _
    %v209 = vld [vmem:[#allocation2] sm:$0xff]
    %v210 = vld [vmem:[#allocation2 + $0x8] sm:$0xff]
    %v211 = vld [vmem:[%s0] sm:$0xff]
    %v212 = vld [vmem:[%s0 + $0x8] sm:$0xff]
    %v213 = vld [vmem:[#allocation7] sm:$0xff]
    %v214 = vld [vmem:[#allocation7 + $0x8] sm:$0xff]
    %215 = vxpose.xlu0.b32.start [1/16] %v211, 128
    %216 = vxpose.xlu0.b32.cont [2/16] %v212, 128
    %217 = vxpose.xlu0.b32.cont [3/16] 0.0, 128
    %218 = vxpose.xlu0.b32.cont [4/16] 0.0, 128
    %219 = vxpose.xlu0.b32.cont [5/16] 0.0, 128
    %220 = vxpose.xlu0.b32.cont [6/16] 0.0, 128
    %221 = vxpose.xlu0.b32.cont [7/16] 0.0, 128
    %222 = vxpose.xlu0.b32.cont [8/16] 0.0, 128
    %223 = vxpose.xlu0.b32.cont [9/16] 0.0, 128
    %224 = vxpose.xlu0.b32.cont [10/16] 0.0, 128
    %225 = vxpose.xlu0.b32.cont [11/16] 0.0, 128
    %226 = vxpose.xlu0.b32.cont [12/16] 0.0, 128
    %227 = vxpose.xlu0.b32.cont [13/16] 0.0, 128
    %228 = vxpose.xlu0.b32.cont [14/16] 0.0, 128
    %229 = vxpose.xlu0.b32.cont [15/16] 0.0, 128
    %230 = vxpose.xlu0.b32.end [16/16] 0.0, 128
    %v231 = vpop.trf.xlu0
    %v232 = vpop.trf.xlu0
    %v233 = vpop.trf.xlu0
    %v234 = vpop.trf.xlu0
    %v235 = vpop.trf.xlu0
    %v236 = vpop.trf.xlu0
    %v237 = vpop.trf.xlu0
    %v238 = vpop.trf.xlu0
    %v239 = vpop.trf.xlu0
    %v240 = vpop.trf.xlu0
    %v241 = vpop.trf.xlu0
    %v242 = vpop.trf.xlu0
    %v243 = vpop.trf.xlu0
    %v244 = vpop.trf.xlu0
    %v245 = vpop.trf.xlu0
    %v246 = vpop.trf.xlu0
    %vm247 = vcmask 130048
    %v249 = vsel %vm247, %v231, 0
    %v252 = vsel %vm247, %v232, 0
    %254 = vmatprep.subr.mxu0 0.0
    %255 = vmatpush1.msra.mxu0 %v213
    %256 = vmatprep.subr.mxu0 0.0
    %257 = vmatpush1.msra.mxu0 %v214
    %258 = vmatprep.subr.mxu0 0.0
    %259 = vmatpush1.msra.mxu0 0.0
    %260 = vmatprep.subr.mxu0 0.0
    %261 = vmatpush1.msra.mxu0 0.0
    %262 = vmatprep.subr.mxu0 0.0
    %263 = vmatpush1.msra.mxu0 0.0
    %264 = vmatprep.subr.mxu0 0.0
    %265 = vmatpush1.msra.mxu0 0.0
    %266 = vmatprep.subr.mxu0 0.0
    %267 = vmatpush1.msra.mxu0 0.0
    %268 = vmatprep.subr.mxu0 0.0
    %269 = vmatpush1.msra.mxu0 0.0
    %270 = vmatprep.subr.mxu0 0.0
    %271 = vmatpush1.msra.mxu0 0.0
    %272 = vmatprep.subr.mxu0 0.0
    %273 = vmatpush1.msra.mxu0 0.0
    %274 = vmatprep.subr.mxu0 0.0
    %275 = vmatpush1.msra.mxu0 0.0
    %276 = vmatprep.subr.mxu0 0.0
    %277 = vmatpush1.msra.mxu0 0.0
    %278 = vmatprep.subr.mxu0 0.0
    %279 = vmatpush1.msra.mxu0 0.0
    %280 = vmatprep.subr.mxu0 0.0
    %281 = vmatpush1.msra.mxu0 0.0
    %282 = vmatprep.subr.mxu0 0.0
    %283 = vmatpush1.msra.mxu0 0.0
    %284 = vmatprep.subr.mxu0 0.0
    %285 = vmatpush1.msra.mxu0 0.0
    %286 = vmatprep.subr.mxu0 0.0
    %287 = vmatpush1.msra.mxu0 0.0
    %288 = vmatprep.subr.mxu0 0.0
    %289 = vmatpush1.msra.mxu0 0.0
    %290 = vmatprep.subr.mxu0 0.0
    %291 = vmatpush1.msra.mxu0 0.0
    %292 = vmatprep.subr.mxu0 0.0
    %293 = vmatpush1.msra.mxu0 0.0
    %294 = vmatprep.subr.mxu0 0.0
    %295 = vmatpush1.msra.mxu0 0.0
    %296 = vmatprep.subr.mxu0 0.0
    %297 = vmatpush1.msra.mxu0 0.0
    %298 = vmatprep.subr.mxu0 0.0
    %299 = vmatpush1.msra.mxu0 0.0
    %300 = vmatprep.subr.mxu0 0.0
    %301 = vmatpush1.msra.mxu0 0.0
    %302 = vmatprep.subr.mxu0 0.0
    %303 = vmatpush1.msra.mxu0 0.0
    %304 = vmatprep.subr.mxu0 0.0
    %305 = vmatpush1.msra.mxu0 0.0
    %306 = vmatprep.subr.mxu0 0.0
    %307 = vmatpush1.msra.mxu0 0.0
    %308 = vmatprep.subr.mxu0 0.0
    %309 = vmatpush1.msra.mxu0 0.0
    %310 = vmatprep.subr.mxu0 0.0
    %311 = vmatpush1.msra.mxu0 0.0
    %312 = vmatprep.subr.mxu0 0.0
    %313 = vmatpush1.msra.mxu0 0.0
    %314 = vmatprep.subr.mxu0 0.0
    %315 = vmatpush1.msra.mxu0 0.0
    %316 = vmatprep.subr.mxu0 0.0
    %317 = vmatpush1.msra.mxu0 0.0
    %318 = vmatprep.mubr.f32.mxu0 0.0
    %319 = vmatmul.mubr.f32.gmra.mrb[0].mxu0 %v249
    %v320 = vpop.f32.mrb[0].mxu0
    %v321 = vadd.f32 0.0, %v320
    %v322 = vpop.f32.mrb[0].mxu0
    %323 = vmatprep.mubr.f32.mxu0 0.0
    %324 = vmatmul.mubr.f32.gmra.mrb[0].mxu0 %v252
    %v325 = vpop.f32.mrb[0].mxu0
    %v326 = vadd.f32 0.0, %v325
    %v327 = vpop.f32.mrb[0].mxu0
    %328 = vdwg.mxu0
    %v329 = vadd.f32 %v209, %v321
    %v330 = vadd.f32 %v210, %v326
    %vm331 = vcmask 523264
    %332 = vst.msk [vmem:[#allocation2] sm:$0xff] %vm331, %v329
    %333 = vst.msk [vmem:[#allocation2 + $0x8] sm:$0xff] %vm331, %v330
    %v334 = vld [vmem:[#allocation3] sm:$0xff]
    %v335 = vld [vmem:[#allocation3 + $0x8] sm:$0xff]
    %v336 = vld [vmem:[#allocation4] sm:$0xff]
    %v337 = vld [vmem:[#allocation4 + $0x8] sm:$0xff]
    %v338 = vld [vmem:[#allocation9] sm:$0xff]
    %v339 = vld [vmem:[#allocation9 + $0x8] sm:$0xff]
    %340 = vxpose.xlu0.b32.start [1/16] %v336, 128
    %341 = vxpose.xlu0.b32.cont [2/16] %v337, 128
    %342 = vxpose.xlu0.b32.cont [3/16] 0.0, 128
    %343 = vxpose.xlu0.b32.cont [4/16] 0.0, 128
    %344 = vxpose.xlu0.b32.cont [5/16] 0.0, 128
    %345 = vxpose.xlu0.b32.cont [6/16] 0.0, 128
    %346 = vxpose.xlu0.b32.cont [7/16] 0.0, 128
    %347 = vxpose.xlu0.b32.cont [8/16] 0.0, 128
    %348 = vxpose.xlu0.b32.cont [9/16] 0.0, 128
    %349 = vxpose.xlu0.b32.cont [10/16] 0.0, 128
    %350 = vxpose.xlu0.b32.cont [11/16] 0.0, 128
    %351 = vxpose.xlu0.b32.cont [12/16] 0.0, 128
    %352 = vxpose.xlu0.b32.cont [13/16] 0.0, 128
    %353 = vxpose.xlu0.b32.cont [14/16] 0.0, 128
    %354 = vxpose.xlu0.b32.cont [15/16] 0.0, 128
    %355 = vxpose.xlu0.b32.end [16/16] 0.0, 128
    %v356 = vpop.trf.xlu0
    %v357 = vpop.trf.xlu0
    %v358 = vpop.trf.xlu0
    %v359 = vpop.trf.xlu0
    %v360 = vpop.trf.xlu0
    %v361 = vpop.trf.xlu0
    %v362 = vpop.trf.xlu0
    %v363 = vpop.trf.xlu0
    %v364 = vpop.trf.xlu0
    %v365 = vpop.trf.xlu0
    %v366 = vpop.trf.xlu0
    %v367 = vpop.trf.xlu0
    %v368 = vpop.trf.xlu0
    %v369 = vpop.trf.xlu0
    %v370 = vpop.trf.xlu0
    %v371 = vpop.trf.xlu0
    %v373 = vsel %vm247, %v356, 0
    %v376 = vsel %vm247, %v357, 0
    %378 = vmatprep.subr.mxu0 0.0
    %379 = vmatpush1.msra.mxu0 %v338
    %380 = vmatprep.subr.mxu0 0.0
    %381 = vmatpush1.msra.mxu0 %v339
    %382 = vmatprep.subr.mxu0 0.0
    %383 = vmatpush1.msra.mxu0 0.0
    %384 = vmatprep.subr.mxu0 0.0
    %385 = vmatpush1.msra.mxu0 0.0
    %386 = vmatprep.subr.mxu0 0.0
    %387 = vmatpush1.msra.mxu0 0.0
    %388 = vmatprep.subr.mxu0 0.0
    %389 = vmatpush1.msra.mxu0 0.0
    %390 = vmatprep.subr.mxu0 0.0
    %391 = vmatpush1.msra.mxu0 0.0
    %392 = vmatprep.subr.mxu0 0.0
    %393 = vmatpush1.msra.mxu0 0.0
    %394 = vmatprep.subr.mxu0 0.0
    %395 = vmatpush1.msra.mxu0 0.0
    %396 = vmatprep.subr.mxu0 0.0
    %397 = vmatpush1.msra.mxu0 0.0
    %398 = vmatprep.subr.mxu0 0.0
    %399 = vmatpush1.msra.mxu0 0.0
    %400 = vmatprep.subr.mxu0 0.0
    %401 = vmatpush1.msra.mxu0 0.0
    %402 = vmatprep.subr.mxu0 0.0
    %403 = vmatpush1.msra.mxu0 0.0
    %404 = vmatprep.subr.mxu0 0.0
    %405 = vmatpush1.msra.mxu0 0.0
    %406 = vmatprep.subr.mxu0 0.0
    %407 = vmatpush1.msra.mxu0 0.0
    %408 = vmatprep.subr.mxu0 0.0
    %409 = vmatpush1.msra.mxu0 0.0
    %410 = vmatprep.subr.mxu0 0.0
    %411 = vmatpush1.msra.mxu0 0.0
    %412 = vmatprep.subr.mxu0 0.0
    %413 = vmatpush1.msra.mxu0 0.0
    %414 = vmatprep.subr.mxu0 0.0
    %415 = vmatpush1.msra.mxu0 0.0
    %416 = vmatprep.subr.mxu0 0.0
    %417 = vmatpush1.msra.mxu0 0.0
    %418 = vmatprep.subr.mxu0 0.0
    %419 = vmatpush1.msra.mxu0 0.0
    %420 = vmatprep.subr.mxu0 0.0
    %421 = vmatpush1.msra.mxu0 0.0
    %422 = vmatprep.subr.mxu0 0.0
    %423 = vmatpush1.msra.mxu0 0.0
    %424 = vmatprep.subr.mxu0 0.0
    %425 = vmatpush1.msra.mxu0 0.0
    %426 = vmatprep.subr.mxu0 0.0
    %427 = vmatpush1.msra.mxu0 0.0
    %428 = vmatprep.subr.mxu0 0.0
    %429 = vmatpush1.msra.mxu0 0.0
    %430 = vmatprep.subr.mxu0 0.0
    %431 = vmatpush1.msra.mxu0 0.0
    %432 = vmatprep.subr.mxu0 0.0
    %433 = vmatpush1.msra.mxu0 0.0
    %434 = vmatprep.subr.mxu0 0.0
    %435 = vmatpush1.msra.mxu0 0.0
    %436 = vmatprep.subr.mxu0 0.0
    %437 = vmatpush1.msra.mxu0 0.0
    %438 = vmatprep.subr.mxu0 0.0
    %439 = vmatpush1.msra.mxu0 0.0
    %440 = vmatprep.subr.mxu0 0.0
    %441 = vmatpush1.msra.mxu0 0.0
    %442 = vmatprep.mubr.f32.mxu0 0.0
    %443 = vmatmul.mubr.f32.gmra.mrb[0].mxu0 %v373
    %v444 = vpop.f32.mrb[0].mxu0
    %v445 = vadd.f32 0.0, %v444
    %v446 = vpop.f32.mrb[0].mxu0
    %447 = vmatprep.mubr.f32.mxu0 0.0
    %448 = vmatmul.mubr.f32.gmra.mrb[0].mxu0 %v376
    %v449 = vpop.f32.mrb[0].mxu0
    %v450 = vadd.f32 0.0, %v449
    %v451 = vpop.f32.mrb[0].mxu0
    %452 = vdwg.mxu0
    %v453 = vadd.f32 %v334, %v445
    %v454 = vadd.f32 %v335, %v450
    %455 = vst.msk [vmem:[#allocation3] sm:$0xff] %vm331, %v453
    %456 = vst.msk [vmem:[#allocation3 + $0x8] sm:$0xff] %vm331, %v454
    // Predicated region
    $region142: #{tpu_custom_call.1} parent=1 // pred_check
      %p457 = pneg %p200
    $region143: #{tpu_custom_call.1} parent=1 // pred_check_branch
      %459 = sbr.rel (%p457) target = $region145
    $region144: #{tpu_custom_call.1} parent=1 // pred_region
      %v460 = vld [vmem:[#allocation2] sm:$0xff]
      %v461 = vld [vmem:[#allocation2 + $0x8] sm:$0xff]
      %v462 = vld [vmem:[%s4] sm:$0x1]
      %v464 = vlaneseq
      %v465 = vshrl.u32 %v464, 7
      %v466 = vsub.s32 0, %v465
      %v467 = vrot.slane %v462, %v466
      %v469 = vadd.f32 %v460, %v467
      %v470 = vadd.f32 %v461, %v467
      %v471 = vld [vmem:[#allocation10] sm:$0x1]
      %v472 = vld [vmem:[#allocation12] sm:$0x1]
      %v473 = vsel %vm331, %v469, 0.0
      %v474 = vsel %vm331, %v470, 0.0
      %v475 = vadd.f32 %v473, %v474
      %v476 = vrot.slane %v475, 4
      %v477 = vadd.f32 %v475, %v476
      %v478 = vrot.slane %v477, 2
      %v479 = vadd.f32 %v477, %v478
      %v480 = vrot.slane %v479, 1
      %v481 = vadd.f32 %v479, %v480
      %v482 = vrcp.pop 16.0
      %v483 = vmul.f32 %v481, %v482
      %v484 = vsub.f32 %v469, %v483
      %v485 = vsub.f32 %v470, %v483
      %v486 = vmul.f32 %v484, %v484
      %v487 = vmul.f32 %v485, %v485
      %v488 = vsel %vm331, %v486, 0.0
      %v489 = vsel %vm331, %v487, 0.0
      %v490 = vadd.f32 %v488, %v489
      %v491 = vrot.slane %v490, 4
      %v492 = vadd.f32 %v490, %v491
      %v493 = vrot.slane %v492, 2
      %v494 = vadd.f32 %v492, %v493
      %v495 = vrot.slane %v494, 1
      %v496 = vadd.f32 %v494, %v495
      %v497 = vmul.f32 %v496, %v482
      %v498 = vadd.f32 %v497, 1e-05
      %v499 = vrsqrt.pop %v498
      %v500 = vmul.f32 %v471, %v499
      %v502 = vlaneseq
      %v503 = vshrl.u32 %v502, 7
      %v504 = vsub.s32 0, %v503
      %v505 = vrot.slane %v500, %v504
      %v507 = vmul.f32 %v505, %v469
      %v508 = vmul.f32 %v505, %v470
      %v509 = vmul.f32 %v500, %v483
      %v510 = vsub.f32 %v472, %v509
      %v512 = vlaneseq
      %v513 = vshrl.u32 %v512, 7
      %v514 = vsub.s32 0, %v513
      %v515 = vrot.slane %v510, %v514
      %v517 = vadd.f32 %v507, %v515
      %v518 = vadd.f32 %v508, %v515
      %vm519 = vcmp.ge.f32.partialorder %v517, 0.0
      %vm520 = vcmp.ge.f32.partialorder %v518, 0.0
      %v521 = vmul.f32 %v517, 0.01
      %v522 = vmul.f32 %v518, 0.01
      %v523 = vsel %vm519, %v517, %v521
      %v524 = vsel %vm520, %v518, %v522
      %v525 = vld [vmem:[%s7] sm:$0xff]
      %v526 = vld [vmem:[%s7 + $0x8] sm:$0xff]
      %v527 = vld [vmem:[%s7 + $0x10] sm:$0xff]
      %v528 = vld [vmem:[%s7 + $0x18] sm:$0xff]
      %v529 = vld [vmem:[%s7 + $0x20] sm:$0xff]
      %v530 = vld [vmem:[%s7 + $0x28] sm:$0xff]
      %v531 = vld [vmem:[%s7 + $0x30] sm:$0xff]
      %v532 = vld [vmem:[%s7 + $0x38] sm:$0xff]
      %v533 = vld [vmem:[#allocation13] sm:$0x1]
      %v535 = vlaneseq
      %v536 = vshrl.u32 %v535, 7
      %v537 = vsub.s32 0, %v536
      %v538 = vrot.slane %v533, %v537
      %v541 = vsel %vm331, %v523, 0
      %v544 = vsel %vm331, %v524, 0
      %546 = vmatprep.subr.mxu0 0.0
      %547 = vmatpush1.msra.mxu0 %v525
      %548 = vmatprep.subr.mxu0 0.0
      %549 = vmatpush1.msra.mxu0 %v526
      %550 = vmatprep.subr.mxu0 0.0
      %551 = vmatpush1.msra.mxu0 %v527
      %552 = vmatprep.subr.mxu0 0.0
      %553 = vmatpush1.msra.mxu0 %v528
      %554 = vmatprep.subr.mxu0 0.0
      %555 = vmatpush1.msra.mxu0 %v529
      %556 = vmatprep.subr.mxu0 0.0
      %557 = vmatpush1.msra.mxu0 %v530
      %558 = vmatprep.subr.mxu0 0.0
      %559 = vmatpush1.msra.mxu0 %v531
      %560 = vmatprep.subr.mxu0 0.0
      %561 = vmatpush1.msra.mxu0 %v532
      %562 = vmatprep.subr.mxu0 0.0
      %563 = vmatpush1.msra.mxu0 0.0
      %564 = vmatprep.subr.mxu0 0.0
      %565 = vmatpush1.msra.mxu0 0.0
      %566 = vmatprep.subr.mxu0 0.0
      %567 = vmatpush1.msra.mxu0 0.0
      %568 = vmatprep.subr.mxu0 0.0
      %569 = vmatpush1.msra.mxu0 0.0
      %570 = vmatprep.subr.mxu0 0.0
      %571 = vmatpush1.msra.mxu0 0.0
      %572 = vmatprep.subr.mxu0 0.0
      %573 = vmatpush1.msra.mxu0 0.0
      %574 = vmatprep.subr.mxu0 0.0
      %575 = vmatpush1.msra.mxu0 0.0
      %576 = vmatprep.subr.mxu0 0.0
      %577 = vmatpush1.msra.mxu0 0.0
      %578 = vmatprep.subr.mxu0 0.0
      %579 = vmatpush1.msra.mxu0 0.0
      %580 = vmatprep.subr.mxu0 0.0
      %581 = vmatpush1.msra.mxu0 0.0
      %582 = vmatprep.subr.mxu0 0.0
      %583 = vmatpush1.msra.mxu0 0.0
      %584 = vmatprep.subr.mxu0 0.0
      %585 = vmatpush1.msra.mxu0 0.0
      %586 = vmatprep.subr.mxu0 0.0
      %587 = vmatpush1.msra.mxu0 0.0
      %588 = vmatprep.subr.mxu0 0.0
      %589 = vmatpush1.msra.mxu0 0.0
      %590 = vmatprep.subr.mxu0 0.0
      %591 = vmatpush1.msra.mxu0 0.0
      %592 = vmatprep.subr.mxu0 0.0
      %593 = vmatpush1.msra.mxu0 0.0
      %594 = vmatprep.subr.mxu0 0.0
      %595 = vmatpush1.msra.mxu0 0.0
      %596 = vmatprep.subr.mxu0 0.0
      %597 = vmatpush1.msra.mxu0 0.0
      %598 = vmatprep.subr.mxu0 0.0
      %599 = vmatpush1.msra.mxu0 0.0
      %600 = vmatprep.subr.mxu0 0.0
      %601 = vmatpush1.msra.mxu0 0.0
      %602 = vmatprep.subr.mxu0 0.0
      %603 = vmatpush1.msra.mxu0 0.0
      %604 = vmatprep.subr.mxu0 0.0
      %605 = vmatpush1.msra.mxu0 0.0
      %606 = vmatprep.subr.mxu0 0.0
      %607 = vmatpush1.msra.mxu0 0.0
      %608 = vmatprep.subr.mxu0 0.0
      %609 = vmatpush1.msra.mxu0 0.0
      %610 = vmatprep.mubr.f32.mxu0 0.0
      %611 = vmatmul.mubr.f32.gmra.mrb[0].mxu0 %v541
      %v612 = vpop.f32.mrb[0].mxu0
      %v613 = vadd.f32 %v538, %v612
      %v614 = vpop.f32.mrb[0].mxu0
      %615 = vmatprep.mubr.f32.mxu0 0.0
      %616 = vmatmul.mubr.f32.gmra.mrb[0].mxu0 %v544
      %v617 = vpop.f32.mrb[0].mxu0
      %v618 = vadd.f32 %v538, %v617
      %v619 = vpop.f32.mrb[0].mxu0
      %620 = vdwg.mxu0
      %v621 = vld [vmem:[#allocation15] sm:$0x1]
      %v622 = vld [vmem:[#allocation16] sm:$0x1]
      %v623 = vsel %vm331, %v613, 0.0
      %v624 = vsel %vm331, %v618, 0.0
      %v625 = vadd.f32 %v623, %v624
      %v626 = vrot.slane %v625, 4
      %v627 = vadd.f32 %v625, %v626
      %v628 = vrot.slane %v627, 2
      %v629 = vadd.f32 %v627, %v628
      %v630 = vrot.slane %v629, 1
      %v631 = vadd.f32 %v629, %v630
      %v632 = vmul.f32 %v631, %v482
      %v633 = vsub.f32 %v613, %v632
      %v634 = vsub.f32 %v618, %v632
      %v635 = vmul.f32 %v633, %v633
      %v636 = vmul.f32 %v634, %v634
      %v637 = vsel %vm331, %v635, 0.0
      %v638 = vsel %vm331, %v636, 0.0
      %v639 = vadd.f32 %v637, %v638
      %v640 = vrot.slane %v639, 4
      %v641 = vadd.f32 %v639, %v640
      %v642 = vrot.slane %v641, 2
      %v643 = vadd.f32 %v641, %v642
      %v644 = vrot.slane %v643, 1
      %v645 = vadd.f32 %v643, %v644
      %v646 = vmul.f32 %v645, %v482
      %v647 = vadd.f32 %v646, 1e-05
      %v648 = vrsqrt.pop %v647
      %v649 = vmul.f32 %v621, %v648
      %v651 = vlaneseq
      %v652 = vshrl.u32 %v651, 7
      %v653 = vsub.s32 0, %v652
      %v654 = vrot.slane %v649, %v653
      %v656 = vmul.f32 %v654, %v613
      %v657 = vmul.f32 %v654, %v618
      %v658 = vmul.f32 %v649, %v632
      %v659 = vsub.f32 %v622, %v658
      %v661 = vlaneseq
      %v662 = vshrl.u32 %v661, 7
      %v663 = vsub.s32 0, %v662
      %v664 = vrot.slane %v659, %v663
      %v666 = vadd.f32 %v656, %v664
      %v667 = vadd.f32 %v657, %v664
      %vm668 = vcmp.ge.f32.partialorder %v666, 0.0
      %vm669 = vcmp.ge.f32.partialorder %v667, 0.0
      %v670 = vmul.f32 %v666, 0.01
      %v671 = vmul.f32 %v667, 0.01
      %v672 = vsel %vm668, %v666, %v670
      %v673 = vsel %vm669, %v667, %v671
      %v674 = vld [vmem:[%s11] sm:$0xff]
      %v675 = vld [vmem:[%s11 + $0x8] sm:$0xff]
      %v676 = vld [vmem:[%s11 + $0x10] sm:$0xff]
      %v677 = vld [vmem:[%s11 + $0x18] sm:$0xff]
      %v678 = vld [vmem:[%s11 + $0x20] sm:$0xff]
      %v679 = vld [vmem:[%s11 + $0x28] sm:$0xff]
      %v680 = vld [vmem:[%s11 + $0x30] sm:$0xff]
      %v681 = vld [vmem:[%s11 + $0x38] sm:$0xff]
      %v682 = vld [vmem:[#allocation18] sm:$0x1]
      %v684 = vlaneseq
      %v685 = vshrl.u32 %v684, 7
      %v686 = vsub.s32 0, %v685
      %v687 = vrot.slane %v682, %v686
      %v690 = vsel %vm331, %v672, 0
      %v693 = vsel %vm331, %v673, 0
      %695 = vmatprep.subr.mxu0 0.0
      %696 = vmatpush1.msra.mxu0 %v674
      %697 = vmatprep.subr.mxu0 0.0
      %698 = vmatpush1.msra.mxu0 %v675
      %699 = vmatprep.subr.mxu0 0.0
      %700 = vmatpush1.msra.mxu0 %v676
      %701 = vmatprep.subr.mxu0 0.0
      %702 = vmatpush1.msra.mxu0 %v677
      %703 = vmatprep.subr.mxu0 0.0
      %704 = vmatpush1.msra.mxu0 %v678
      %705 = vmatprep.subr.mxu0 0.0
      %706 = vmatpush1.msra.mxu0 %v679
      %707 = vmatprep.subr.mxu0 0.0
      %708 = vmatpush1.msra.mxu0 %v680
      %709 = vmatprep.subr.mxu0 0.0
      %710 = vmatpush1.msra.mxu0 %v681
      %711 = vmatprep.subr.mxu0 0.0
      %712 = vmatpush1.msra.mxu0 0.0
      %713 = vmatprep.subr.mxu0 0.0
      %714 = vmatpush1.msra.mxu0 0.0
      %715 = vmatprep.subr.mxu0 0.0
      %716 = vmatpush1.msra.mxu0 0.0
      %717 = vmatprep.subr.mxu0 0.0
      %718 = vmatpush1.msra.mxu0 0.0
      %719 = vmatprep.subr.mxu0 0.0
      %720 = vmatpush1.msra.mxu0 0.0
      %721 = vmatprep.subr.mxu0 0.0
      %722 = vmatpush1.msra.mxu0 0.0
      %723 = vmatprep.subr.mxu0 0.0
      %724 = vmatpush1.msra.mxu0 0.0
      %725 = vmatprep.subr.mxu0 0.0
      %726 = vmatpush1.msra.mxu0 0.0
      %727 = vmatprep.subr.mxu0 0.0
      %728 = vmatpush1.msra.mxu0 0.0
      %729 = vmatprep.subr.mxu0 0.0
      %730 = vmatpush1.msra.mxu0 0.0
      %731 = vmatprep.subr.mxu0 0.0
      %732 = vmatpush1.msra.mxu0 0.0
      %733 = vmatprep.subr.mxu0 0.0
      %734 = vmatpush1.msra.mxu0 0.0
      %735 = vmatprep.subr.mxu0 0.0
      %736 = vmatpush1.msra.mxu0 0.0
      %737 = vmatprep.subr.mxu0 0.0
      %738 = vmatpush1.msra.mxu0 0.0
      %739 = vmatprep.subr.mxu0 0.0
      %740 = vmatpush1.msra.mxu0 0.0
      %741 = vmatprep.subr.mxu0 0.0
      %742 = vmatpush1.msra.mxu0 0.0
      %743 = vmatprep.subr.mxu0 0.0
      %744 = vmatpush1.msra.mxu0 0.0
      %745 = vmatprep.subr.mxu0 0.0
      %746 = vmatpush1.msra.mxu0 0.0
      %747 = vmatprep.subr.mxu0 0.0
      %748 = vmatpush1.msra.mxu0 0.0
      %749 = vmatprep.subr.mxu0 0.0
      %750 = vmatpush1.msra.mxu0 0.0
      %751 = vmatprep.subr.mxu0 0.0
      %752 = vmatpush1.msra.mxu0 0.0
      %753 = vmatprep.subr.mxu0 0.0
      %754 = vmatpush1.msra.mxu0 0.0
      %755 = vmatprep.subr.mxu0 0.0
      %756 = vmatpush1.msra.mxu0 0.0
      %757 = vmatprep.subr.mxu0 0.0
      %758 = vmatpush1.msra.mxu0 0.0
      %759 = vmatprep.mubr.f32.mxu0 0.0
      %760 = vmatmul.mubr.f32.gmra.mrb[0].mxu0 %v690
      %v761 = vpop.f32.mrb[0].mxu0
      %v762 = vadd.f32 %v687, %v761
      %v763 = vpop.f32.mrb[0].mxu0
      %764 = vmatprep.mubr.f32.mxu0 0.0
      %765 = vmatmul.mubr.f32.gmra.mrb[0].mxu0 %v693
      %v766 = vpop.f32.mrb[0].mxu0
      %v767 = vadd.f32 %v687, %v766
      %v768 = vpop.f32.mrb[0].mxu0
      %769 = vdwg.mxu0
      %v770 = vsel %vm247, %v762, -inf
      %771 = vmax.xlane.f32.xlu0 %v770
      %v772 = vpop.xlane.xlu0 %771
      %v773 = vsel %vm247, %v767, -inf
      %774 = vmax.xlane.f32.xlu0 %v773
      %v775 = vpop.xlane.xlu0 %774
      %v776 = vsub.f32 %v762, %v772
      %v777 = vsub.f32 %v767, %v775
      %v778 = vmul.f32 %v776, 1.442695
      %v779 = vpow.pop %v778
      %v780 = vmul.f32 %v777, 1.442695
      %v781 = vpow.pop %v780
      %v782 = vsel %vm247, %v779, 0.0
      %783 = vadd.xlane.f32.xlu0 %v782
      %v784 = vpop.xlane.xlu0 %783
      %v785 = vsel %vm247, %v781, 0.0
      %786 = vadd.xlane.f32.xlu0 %v785
      %v787 = vpop.xlane.xlu0 %786
      %v788 = vrcp.pop %v784
      %v789 = vrcp.pop %v787
      %v790 = vmul.f32 %v779, %v788
      %v791 = vmul.f32 %v781, %v789
      %v792 = vld [vmem:[%s22] sm:$0xff]
      %v793 = vld [vmem:[%s22 + $0x8] sm:$0xff]
      %v795 = vsel %vm247, %v790, 0
      %v798 = vsel %vm247, %v791, 0
      %800 = vmatprep.subr.mxu0 0.0
      %801 = vmatpush1.msra.mxu0 %v792
      %802 = vmatprep.subr.mxu0 0.0
      %803 = vmatpush1.msra.mxu0 %v793
      %804 = vmatprep.subr.mxu0 0.0
      %805 = vmatpush1.msra.mxu0 0.0
      %806 = vmatprep.subr.mxu0 0.0
      %807 = vmatpush1.msra.mxu0 0.0
      %808 = vmatprep.subr.mxu0 0.0
      %809 = vmatpush1.msra.mxu0 0.0
      %810 = vmatprep.subr.mxu0 0.0
      %811 = vmatpush1.msra.mxu0 0.0
      %812 = vmatprep.subr.mxu0 0.0
      %813 = vmatpush1.msra.mxu0 0.0
      %814 = vmatprep.subr.mxu0 0.0
      %815 = vmatpush1.msra.mxu0 0.0
      %816 = vmatprep.subr.mxu0 0.0
      %817 = vmatpush1.msra.mxu0 0.0
      %818 = vmatprep.subr.mxu0 0.0
      %819 = vmatpush1.msra.mxu0 0.0
      %820 = vmatprep.subr.mxu0 0.0
      %821 = vmatpush1.msra.mxu0 0.0
      %822 = vmatprep.subr.mxu0 0.0
      %823 = vmatpush1.msra.mxu0 0.0
      %824 = vmatprep.subr.mxu0 0.0
      %825 = vmatpush1.msra.mxu0 0.0
      %826 = vmatprep.subr.mxu0 0.0
      %827 = vmatpush1.msra.mxu0 0.0
      %828 = vmatprep.subr.mxu0 0.0
      %829 = vmatpush1.msra.mxu0 0.0
      %830 = vmatprep.subr.mxu0 0.0
      %831 = vmatpush1.msra.mxu0 0.0
      %832 = vmatprep.subr.mxu0 0.0
      %833 = vmatpush1.msra.mxu0 0.0
      %834 = vmatprep.subr.mxu0 0.0
      %835 = vmatpush1.msra.mxu0 0.0
      %836 = vmatprep.subr.mxu0 0.0
      %837 = vmatpush1.msra.mxu0 0.0
      %838 = vmatprep.subr.mxu0 0.0
      %839 = vmatpush1.msra.mxu0 0.0
      %840 = vmatprep.subr.mxu0 0.0
      %841 = vmatpush1.msra.mxu0 0.0
      %842 = vmatprep.subr.mxu0 0.0
      %843 = vmatpush1.msra.mxu0 0.0
      %844 = vmatprep.subr.mxu0 0.0
      %845 = vmatpush1.msra.mxu0 0.0
      %846 = vmatprep.subr.mxu0 0.0
      %847 = vmatpush1.msra.mxu0 0.0
      %848 = vmatprep.subr.mxu0 0.0
      %849 = vmatpush1.msra.mxu0 0.0
      %850 = vmatprep.subr.mxu0 0.0
      %851 = vmatpush1.msra.mxu0 0.0
      %852 = vmatprep.subr.mxu0 0.0
      %853 = vmatpush1.msra.mxu0 0.0
      %854 = vmatprep.subr.mxu0 0.0
      %855 = vmatpush1.msra.mxu0 0.0
      %856 = vmatprep.subr.mxu0 0.0
      %857 = vmatpush1.msra.mxu0 0.0
      %858 = vmatprep.subr.mxu0 0.0
      %859 = vmatpush1.msra.mxu0 0.0
      %860 = vmatprep.subr.mxu0 0.0
      %861 = vmatpush1.msra.mxu0 0.0
      %862 = vmatprep.subr.mxu0 0.0
      %863 = vmatpush1.msra.mxu0 0.0
      %864 = vmatprep.mubr.f32.mxu0 0.0
      %865 = vmatmul.mubr.f32.gmra.mrb[0].mxu0 %v795
      %v866 = vpop.f32.mrb[0].mxu0
      %v867 = vadd.f32 0.0, %v866
      %v868 = vpop.f32.mrb[0].mxu0
      %869 = vmatprep.mubr.f32.mxu0 0.0
      %870 = vmatmul.mubr.f32.gmra.mrb[0].mxu0 %v798
      %v871 = vpop.f32.mrb[0].mxu0
      %v872 = vadd.f32 0.0, %v871
      %v873 = vpop.f32.mrb[0].mxu0
      %874 = vdwg.mxu0
      %vm875 = vcmp.ge.f32.partialorder %v867, 0.0
      %vm876 = vcmp.ge.f32.partialorder %v872, 0.0
      %v877 = vmul.f32 %v867, 0.01
      %v878 = vmul.f32 %v872, 0.01
      %v879 = vsel %vm875, %v867, %v877
      %v880 = vsel %vm876, %v872, %v878
      %v881 = vld [vmem:[#allocation3] sm:$0xff]
      %v882 = vld [vmem:[#allocation3 + $0x8] sm:$0xff]
      %v883 = vld [vmem:[#allocation19] sm:$0x1]
      %v885 = vlaneseq
      %v886 = vshrl.u32 %v885, 7
      %v887 = vsub.s32 0, %v886
      %v888 = vrot.slane %v883, %v887
      %v890 = vadd.f32 %v881, %v888
      %v891 = vadd.f32 %v882, %v888
      %v892 = vld [vmem:[%s14] sm:$0x1]
      %v893 = vld [vmem:[%s15] sm:$0x1]
      %v894 = vsel %vm331, %v890, 0.0
      %v895 = vsel %vm331, %v891, 0.0
      %v896 = vadd.f32 %v894, %v895
      %v897 = vrot.slane %v896, 4
      %v898 = vadd.f32 %v896, %v897
      %v899 = vrot.slane %v898, 2
      %v900 = vadd.f32 %v898, %v899
      %v901 = vrot.slane %v900, 1
      %v902 = vadd.f32 %v900, %v901
      %v903 = vmul.f32 %v902, %v482
      %v904 = vsub.f32 %v890, %v903
      %v905 = vsub.f32 %v891, %v903
      %v906 = vmul.f32 %v904, %v904
      %v907 = vmul.f32 %v905, %v905
      %v908 = vsel %vm331, %v906, 0.0
      %v909 = vsel %vm331, %v907, 0.0
      %v910 = vadd.f32 %v908, %v909
      %v911 = vrot.slane %v910, 4
      %v912 = vadd.f32 %v910, %v911
      %v913 = vrot.slane %v912, 2
      %v914 = vadd.f32 %v912, %v913
      %v915 = vrot.slane %v914, 1
      %v916 = vadd.f32 %v914, %v915
      %v917 = vmul.f32 %v916, %v482
      %v918 = vadd.f32 %v917, 1e-05
      %v919 = vrsqrt.pop %v918
      %v920 = vmul.f32 %v892, %v919
      %v922 = vlaneseq
      %v923 = vshrl.u32 %v922, 7
      %v924 = vsub.s32 0, %v923
      %v925 = vrot.slane %v920, %v924
      %v927 = vmul.f32 %v925, %v890
      %v928 = vmul.f32 %v925, %v891
      %v929 = vmul.f32 %v920, %v903
      %v930 = vsub.f32 %v893, %v929
      %v932 = vlaneseq
      %v933 = vshrl.u32 %v932, 7
      %v934 = vsub.s32 0, %v933
      %v935 = vrot.slane %v930, %v934
      %v937 = vadd.f32 %v927, %v935
      %v938 = vadd.f32 %v928, %v935
      %vm939 = vcmp.ge.f32.partialorder %v937, 0.0
      %vm940 = vcmp.ge.f32.partialorder %v938, 0.0
      %v941 = vmul.f32 %v937, 0.01
      %v942 = vmul.f32 %v938, 0.01
      %v943 = vsel %vm939, %v937, %v941
      %v944 = vsel %vm940, %v938, %v942
      %v945 = vld [vmem:[%s16] sm:$0xff]
      %v946 = vld [vmem:[%s16 + $0x8] sm:$0xff]
      %v947 = vld [vmem:[%s16 + $0x10] sm:$0xff]
      %v948 = vld [vmem:[%s16 + $0x18] sm:$0xff]
      %v949 = vld [vmem:[%s16 + $0x20] sm:$0xff]
      %v950 = vld [vmem:[%s16 + $0x28] sm:$0xff]
      %v951 = vld [vmem:[%s16 + $0x30] sm:$0xff]
      %v952 = vld [vmem:[%s16 + $0x38] sm:$0xff]
      %v953 = vld [vmem:[%s17] sm:$0x1]
      %v955 = vlaneseq
      %v956 = vshrl.u32 %v955, 7
      %v957 = vsub.s32 0, %v956
      %v958 = vrot.slane %v953, %v957
      %v961 = vsel %vm331, %v943, 0
      %v964 = vsel %vm331, %v944, 0
      %966 = vmatprep.subr.mxu0 0.0
      %967 = vmatpush1.msra.mxu0 %v945
      %968 = vmatprep.subr.mxu0 0.0
      %969 = vmatpush1.msra.mxu0 %v946
      %970 = vmatprep.subr.mxu0 0.0
      %971 = vmatpush1.msra.mxu0 %v947
      %972 = vmatprep.subr.mxu0 0.0
      %973 = vmatpush1.msra.mxu0 %v948
      %974 = vmatprep.subr.mxu0 0.0
      %975 = vmatpush1.msra.mxu0 %v949
      %976 = vmatprep.subr.mxu0 0.0
      %977 = vmatpush1.msra.mxu0 %v950
      %978 = vmatprep.subr.mxu0 0.0
      %979 = vmatpush1.msra.mxu0 %v951
      %980 = vmatprep.subr.mxu0 0.0
      %981 = vmatpush1.msra.mxu0 %v952
      %982 = vmatprep.subr.mxu0 0.0
      %983 = vmatpush1.msra.mxu0 0.0
      %984 = vmatprep.subr.mxu0 0.0
      %985 = vmatpush1.msra.mxu0 0.0
      %986 = vmatprep.subr.mxu0 0.0
      %987 = vmatpush1.msra.mxu0 0.0
      %988 = vmatprep.subr.mxu0 0.0
      %989 = vmatpush1.msra.mxu0 0.0
      %990 = vmatprep.subr.mxu0 0.0
      %991 = vmatpush1.msra.mxu0 0.0
      %992 = vmatprep.subr.mxu0 0.0
      %993 = vmatpush1.msra.mxu0 0.0
      %994 = vmatprep.subr.mxu0 0.0
      %995 = vmatpush1.msra.mxu0 0.0
      %996 = vmatprep.subr.mxu0 0.0
      %997 = vmatpush1.msra.mxu0 0.0
      %998 = vmatprep.subr.mxu0 0.0
      %999 = vmatpush1.msra.mxu0 0.0
      %1000 = vmatprep.subr.mxu0 0.0
      %1001 = vmatpush1.msra.mxu0 0.0
      %1002 = vmatprep.subr.mxu0 0.0
      %1003 = vmatpush1.msra.mxu0 0.0
      %1004 = vmatprep.subr.mxu0 0.0
      %1005 = vmatpush1.msra.mxu0 0.0
      %1006 = vmatprep.subr.mxu0 0.0
      %1007 = vmatpush1.msra.mxu0 0.0
      %1008 = vmatprep.subr.mxu0 0.0
      %1009 = vmatpush1.msra.mxu0 0.0
      %1010 = vmatprep.subr.mxu0 0.0
      %1011 = vmatpush1.msra.mxu0 0.0
      %1012 = vmatprep.subr.mxu0 0.0
      %1013 = vmatpush1.msra.mxu0 0.0
      %1014 = vmatprep.subr.mxu0 0.0
      %1015 = vmatpush1.msra.mxu0 0.0
      %1016 = vmatprep.subr.mxu0 0.0
      %1017 = vmatpush1.msra.mxu0 0.0
      %1018 = vmatprep.subr.mxu0 0.0
      %1019 = vmatpush1.msra.mxu0 0.0
      %1020 = vmatprep.subr.mxu0 0.0
      %1021 = vmatpush1.msra.mxu0 0.0
      %1022 = vmatprep.subr.mxu0 0.0
      %1023 = vmatpush1.msra.mxu0 0.0
      %1024 = vmatprep.subr.mxu0 0.0
      %1025 = vmatpush1.msra.mxu0 0.0
      %1026 = vmatprep.subr.mxu0 0.0
      %1027 = vmatpush1.msra.mxu0 0.0
      %1028 = vmatprep.subr.mxu0 0.0
      %1029 = vmatpush1.msra.mxu0 0.0
      %1030 = vmatprep.mubr.f32.mxu0 0.0
      %1031 = vmatmul.mubr.f32.gmra.mrb[0].mxu0 %v961
      %v1032 = vpop.f32.mrb[0].mxu0
      %v1033 = vadd.f32 %v958, %v1032
      %v1034 = vpop.f32.mrb[0].mxu0
      %1035 = vmatprep.mubr.f32.mxu0 0.0
      %1036 = vmatmul.mubr.f32.gmra.mrb[0].mxu0 %v964
      %v1037 = vpop.f32.mrb[0].mxu0
      %v1038 = vadd.f32 %v958, %v1037
      %v1039 = vpop.f32.mrb[0].mxu0
      %1040 = vdwg.mxu0
      %v1041 = vld [vmem:[%s18] sm:$0x1]
      %v1042 = vld [vmem:[%s19] sm:$0x1]
      %v1043 = vsel %vm331, %v1033, 0.0
      %v1044 = vsel %vm331, %v1038, 0.0
      %v1045 = vadd.f32 %v1043, %v1044
      %v1046 = vrot.slane %v1045, 4
      %v1047 = vadd.f32 %v1045, %v1046
      %v1048 = vrot.slane %v1047, 2
      %v1049 = vadd.f32 %v1047, %v1048
      %v1050 = vrot.slane %v1049, 1
      %v1051 = vadd.f32 %v1049, %v1050
      %v1052 = vmul.f32 %v1051, %v482
      %v1053 = vsub.f32 %v1033, %v1052
      %v1054 = vsub.f32 %v1038, %v1052
      %v1055 = vmul.f32 %v1053, %v1053
      %v1056 = vmul.f32 %v1054, %v1054
      %v1057 = vsel %vm331, %v1055, 0.0
      %v1058 = vsel %vm331, %v1056, 0.0
      %v1059 = vadd.f32 %v1057, %v1058
      %v1060 = vrot.slane %v1059, 4
      %v1061 = vadd.f32 %v1059, %v1060
      %v1062 = vrot.slane %v1061, 2
      %v1063 = vadd.f32 %v1061, %v1062
      %v1064 = vrot.slane %v1063, 1
      %v1065 = vadd.f32 %v1063, %v1064
      %v1066 = vmul.f32 %v1065, %v482
      %v1067 = vadd.f32 %v1066, 1e-05
      %v1068 = vrsqrt.pop %v1067
      %v1069 = vmul.f32 %v1041, %v1068
      %v1071 = vlaneseq
      %v1072 = vshrl.u32 %v1071, 7
      %v1073 = vsub.s32 0, %v1072
      %v1074 = vrot.slane %v1069, %v1073
      %v1076 = vmul.f32 %v1074, %v1033
      %v1077 = vmul.f32 %v1074, %v1038
      %v1078 = vmul.f32 %v1069, %v1052
      %v1079 = vsub.f32 %v1042, %v1078
      %v1081 = vlaneseq
      %v1082 = vshrl.u32 %v1081, 7
      %v1083 = vsub.s32 0, %v1082
      %v1084 = vrot.slane %v1079, %v1083
      %v1086 = vadd.f32 %v1076, %v1084
      %v1087 = vadd.f32 %v1077, %v1084
      %vm1088 = vcmp.ge.f32.partialorder %v1086, 0.0
      %vm1089 = vcmp.ge.f32.partialorder %v1087, 0.0
      %v1090 = vmul.f32 %v1086, 0.01
      %v1091 = vmul.f32 %v1087, 0.01
      %v1092 = vsel %vm1088, %v1086, %v1090
      %v1093 = vsel %vm1089, %v1087, %v1091
      %v1094 = vld [vmem:[%s20] sm:$0xff]
      %v1095 = vld [vmem:[%s20 + $0x8] sm:$0xff]
      %v1096 = vld [vmem:[%s20 + $0x10] sm:$0xff]
      %v1097 = vld [vmem:[%s20 + $0x18] sm:$0xff]
      %v1098 = vld [vmem:[%s20 + $0x20] sm:$0xff]
      %v1099 = vld [vmem:[%s20 + $0x28] sm:$0xff]
      %v1100 = vld [vmem:[%s20 + $0x30] sm:$0xff]
      %v1101 = vld [vmem:[%s20 + $0x38] sm:$0xff]
      %v1102 = vld [vmem:[%s21] sm:$0x1]
      %v1104 = vlaneseq
      %v1105 = vshrl.u32 %v1104, 7
      %v1106 = vsub.s32 0, %v1105
      %v1107 = vrot.slane %v1102, %v1106
      %v1110 = vsel %vm331, %v1092, 0
      %v1113 = vsel %vm331, %v1093, 0
      %1115 = vmatprep.subr.mxu0 0.0
      %1116 = vmatpush1.msra.mxu0 %v1094
      %1117 = vmatprep.subr.mxu0 0.0
      %1118 = vmatpush1.msra.mxu0 %v1095
      %1119 = vmatprep.subr.mxu0 0.0
      %1120 = vmatpush1.msra.mxu0 %v1096
      %1121 = vmatprep.subr.mxu0 0.0
      %1122 = vmatpush1.msra.mxu0 %v1097
      %1123 = vmatprep.subr.mxu0 0.0
      %1124 = vmatpush1.msra.mxu0 %v1098
      %1125 = vmatprep.subr.mxu0 0.0
      %1126 = vmatpush1.msra.mxu0 %v1099
      %1127 = vmatprep.subr.mxu0 0.0
      %1128 = vmatpush1.msra.mxu0 %v1100
      %1129 = vmatprep.subr.mxu0 0.0
      %1130 = vmatpush1.msra.mxu0 %v1101
      %1131 = vmatprep.subr.mxu0 0.0
      %1132 = vmatpush1.msra.mxu0 0.0
      %1133 = vmatprep.subr.mxu0 0.0
      %1134 = vmatpush1.msra.mxu0 0.0
      %1135 = vmatprep.subr.mxu0 0.0
      %1136 = vmatpush1.msra.mxu0 0.0
      %1137 = vmatprep.subr.mxu0 0.0
      %1138 = vmatpush1.msra.mxu0 0.0
      %1139 = vmatprep.subr.mxu0 0.0
      %1140 = vmatpush1.msra.mxu0 0.0
      %1141 = vmatprep.subr.mxu0 0.0
      %1142 = vmatpush1.msra.mxu0 0.0
      %1143 = vmatprep.subr.mxu0 0.0
      %1144 = vmatpush1.msra.mxu0 0.0
      %1145 = vmatprep.subr.mxu0 0.0
      %1146 = vmatpush1.msra.mxu0 0.0
      %1147 = vmatprep.subr.mxu0 0.0
      %1148 = vmatpush1.msra.mxu0 0.0
      %1149 = vmatprep.subr.mxu0 0.0
      %1150 = vmatpush1.msra.mxu0 0.0
      %1151 = vmatprep.subr.mxu0 0.0
      %1152 = vmatpush1.msra.mxu0 0.0
      %1153 = vmatprep.subr.mxu0 0.0
      %1154 = vmatpush1.msra.mxu0 0.0
      %1155 = vmatprep.subr.mxu0 0.0
      %1156 = vmatpush1.msra.mxu0 0.0
      %1157 = vmatprep.subr.mxu0 0.0
      %1158 = vmatpush1.msra.mxu0 0.0
      %1159 = vmatprep.subr.mxu0 0.0
      %1160 = vmatpush1.msra.mxu0 0.0
      %1161 = vmatprep.subr.mxu0 0.0
      %1162 = vmatpush1.msra.mxu0 0.0
      %1163 = vmatprep.subr.mxu0 0.0
      %1164 = vmatpush1.msra.mxu0 0.0
      %1165 = vmatprep.subr.mxu0 0.0
      %1166 = vmatpush1.msra.mxu0 0.0
      %1167 = vmatprep.subr.mxu0 0.0
      %1168 = vmatpush1.msra.mxu0 0.0
      %1169 = vmatprep.subr.mxu0 0.0
      %1170 = vmatpush1.msra.mxu0 0.0
      %1171 = vmatprep.subr.mxu0 0.0
      %1172 = vmatpush1.msra.mxu0 0.0
      %1173 = vmatprep.subr.mxu0 0.0
      %1174 = vmatpush1.msra.mxu0 0.0
      %1175 = vmatprep.subr.mxu0 0.0
      %1176 = vmatpush1.msra.mxu0 0.0
      %1177 = vmatprep.subr.mxu0 0.0
      %1178 = vmatpush1.msra.mxu0 0.0
      %1179 = vmatprep.mubr.f32.mxu0 0.0
      %1180 = vmatmul.mubr.f32.gmra.mrb[0].mxu0 %v1110
      %v1181 = vpop.f32.mrb[0].mxu0
      %v1182 = vadd.f32 %v1107, %v1181
      %v1183 = vpop.f32.mrb[0].mxu0
      %1184 = vmatprep.mubr.f32.mxu0 0.0
      %1185 = vmatmul.mubr.f32.gmra.mrb[0].mxu0 %v1113
      %v1186 = vpop.f32.mrb[0].mxu0
      %v1187 = vadd.f32 %v1107, %v1186
      %v1188 = vpop.f32.mrb[0].mxu0
      %1189 = vdwg.mxu0
      %v1190 = vsel %vm247, %v1182, -inf
      %1191 = vmax.xlane.f32.xlu0 %v1190
      %v1192 = vpop.xlane.xlu0 %1191
      %v1193 = vsel %vm247, %v1187, -inf
      %1194 = vmax.xlane.f32.xlu0 %v1193
      %v1195 = vpop.xlane.xlu0 %1194
      %v1196 = vsub.f32 %v1182, %v1192
      %v1197 = vsub.f32 %v1187, %v1195
      %v1198 = vmul.f32 %v1196, 1.442695
      %v1199 = vpow.pop %v1198
      %v1200 = vmul.f32 %v1197, 1.442695
      %v1201 = vpow.pop %v1200
      %v1202 = vsel %vm247, %v1199, 0.0
      %1203 = vadd.xlane.f32.xlu0 %v1202
      %v1204 = vpop.xlane.xlu0 %1203
      %v1205 = vsel %vm247, %v1201, 0.0
      %1206 = vadd.xlane.f32.xlu0 %v1205
      %v1207 = vpop.xlane.xlu0 %1206
      %v1208 = vrcp.pop %v1204
      %v1209 = vrcp.pop %v1207
      %v1210 = vmul.f32 %v1199, %v1208
      %v1211 = vmul.f32 %v1201, %v1209
      %v1212 = vld [vmem:[%s23] sm:$0xff]
      %v1213 = vld [vmem:[%s23 + $0x8] sm:$0xff]
      %v1215 = vsel %vm247, %v1210, 0
      %v1218 = vsel %vm247, %v1211, 0
      %1220 = vmatprep.subr.mxu0 0.0
      %1221 = vmatpush1.msra.mxu0 %v1212
      %1222 = vmatprep.subr.mxu0 0.0
      %1223 = vmatpush1.msra.mxu0 %v1213
      %1224 = vmatprep.subr.mxu0 0.0
      %1225 = vmatpush1.msra.mxu0 0.0
      %1226 = vmatprep.subr.mxu0 0.0
      %1227 = vmatpush1.msra.mxu0 0.0
      %1228 = vmatprep.subr.mxu0 0.0
      %1229 = vmatpush1.msra.mxu0 0.0
      %1230 = vmatprep.subr.mxu0 0.0
      %1231 = vmatpush1.msra.mxu0 0.0
      %1232 = vmatprep.subr.mxu0 0.0
      %1233 = vmatpush1.msra.mxu0 0.0
      %1234 = vmatprep.subr.mxu0 0.0
      %1235 = vmatpush1.msra.mxu0 0.0
      %1236 = vmatprep.subr.mxu0 0.0
      %1237 = vmatpush1.msra.mxu0 0.0
      %1238 = vmatprep.subr.mxu0 0.0
      %1239 = vmatpush1.msra.mxu0 0.0
      %1240 = vmatprep.subr.mxu0 0.0
      %1241 = vmatpush1.msra.mxu0 0.0
      %1242 = vmatprep.subr.mxu0 0.0
      %1243 = vmatpush1.msra.mxu0 0.0
      %1244 = vmatprep.subr.mxu0 0.0
      %1245 = vmatpush1.msra.mxu0 0.0
      %1246 = vmatprep.subr.mxu0 0.0
      %1247 = vmatpush1.msra.mxu0 0.0
      %1248 = vmatprep.subr.mxu0 0.0
      %1249 = vmatpush1.msra.mxu0 0.0
      %1250 = vmatprep.subr.mxu0 0.0
      %1251 = vmatpush1.msra.mxu0 0.0
      %1252 = vmatprep.subr.mxu0 0.0
      %1253 = vmatpush1.msra.mxu0 0.0
      %1254 = vmatprep.subr.mxu0 0.0
      %1255 = vmatpush1.msra.mxu0 0.0
      %1256 = vmatprep.subr.mxu0 0.0
      %1257 = vmatpush1.msra.mxu0 0.0
      %1258 = vmatprep.subr.mxu0 0.0
      %1259 = vmatpush1.msra.mxu0 0.0
      %1260 = vmatprep.subr.mxu0 0.0
      %1261 = vmatpush1.msra.mxu0 0.0
      %1262 = vmatprep.subr.mxu0 0.0
      %1263 = vmatpush1.msra.mxu0 0.0
      %1264 = vmatprep.subr.mxu0 0.0
      %1265 = vmatpush1.msra.mxu0 0.0
      %1266 = vmatprep.subr.mxu0 0.0
      %1267 = vmatpush1.msra.mxu0 0.0
      %1268 = vmatprep.subr.mxu0 0.0
      %1269 = vmatpush1.msra.mxu0 0.0
      %1270 = vmatprep.subr.mxu0 0.0
      %1271 = vmatpush1.msra.mxu0 0.0
      %1272 = vmatprep.subr.mxu0 0.0
      %1273 = vmatpush1.msra.mxu0 0.0
      %1274 = vmatprep.subr.mxu0 0.0
      %1275 = vmatpush1.msra.mxu0 0.0
      %1276 = vmatprep.subr.mxu0 0.0
      %1277 = vmatpush1.msra.mxu0 0.0
      %1278 = vmatprep.subr.mxu0 0.0
      %1279 = vmatpush1.msra.mxu0 0.0
      %1280 = vmatprep.subr.mxu0 0.0
      %1281 = vmatpush1.msra.mxu0 0.0
      %1282 = vmatprep.subr.mxu0 0.0
      %1283 = vmatpush1.msra.mxu0 0.0
      %1284 = vmatprep.mubr.f32.mxu0 0.0
      %1285 = vmatmul.mubr.f32.gmra.mrb[0].mxu0 %v1215
      %v1286 = vpop.f32.mrb[0].mxu0
      %v1287 = vadd.f32 0.0, %v1286
      %v1288 = vpop.f32.mrb[0].mxu0
      %1289 = vmatprep.mubr.f32.mxu0 0.0
      %1290 = vmatmul.mubr.f32.gmra.mrb[0].mxu0 %v1218
      %v1291 = vpop.f32.mrb[0].mxu0
      %v1292 = vadd.f32 0.0, %v1291
      %v1293 = vpop.f32.mrb[0].mxu0
      %1294 = vdwg.mxu0
      %vm1295 = vcmp.ge.f32.partialorder %v1287, 0.0
      %vm1296 = vcmp.ge.f32.partialorder %v1292, 0.0
      %v1297 = vmul.f32 %v1287, 0.01
      %v1298 = vmul.f32 %v1292, 0.01
      %v1299 = vsel %vm1295, %v1287, %v1297
      %v1300 = vsel %vm1296, %v1292, %v1298
      %v1301 = vadd.f32 %v879, %v1299
      %v1302 = vadd.f32 %v880, %v1300
      %v1303 = vmul.f32 %v1301, 3.0
      %v1304 = vmul.f32 %v1302, 3.0
      %vm1305 = vcmask 261120
      %1306 = vst.msk [vmem:[#allocation21] sm:$0xff] %vm1305, %v1303
      %1307 = vst.msk [vmem:[#allocation21 + $0x8] sm:$0xff] %vm1305, %v1304
    $region145: #{tpu_custom_call.1} parent=1 // pred_fallthru
      _
    // Predicated region
    $region146: #{tpu_custom_call.1} parent=1 // pred_check
      _
    $region147: #{tpu_custom_call.1} parent=1 // pred_check_branch
      %1309 = sbr.rel (0) target = $region149
    $region148: #{tpu_custom_call.1} parent=1 // pred_region
      %s1311 = ssub.s32 256, 256
      %1312 = vsyncadd [#allocation6], %s1311
      %s1313 = sshll.u32 [#allocation21], 4
      %s1314 = int_to_ptr.vmem [resolvable:$true] %s1313
      %1319 = dma.vmem_to_hbm [thread:$0]  %s1314, 256, %s24, [#allocation6], 128, 128, 8
    $region149: #{tpu_custom_call.1} parent=1 // pred_fallthru
      _
    // Predicated region
    $region150: #{tpu_custom_call.1} parent=1 // pred_check
      _
    $region151: #{tpu_custom_call.1} parent=1 // pred_check_branch
      %1321 = sbr.rel (0) target = $region153
    $region152: #{tpu_custom_call.1} parent=1 // pred_region
      %1322 = dma.done [#allocation6], 256
    $region153: #{tpu_custom_call.1} parent=1 // pred_fallthru
      _
    %1323 = vsyncpa [#allocation5], 1
    %1324 = vsyncpa [#allocation8], 1
    %1325 = vsyncpa [#allocation11], 1
    %1326 = vsyncpa [#allocation14], 1
    %1327 = vsyncpa [#allocation17], 1
    %1328 = vsyncpa [#allocation20], 1
    %1329 = vsyncpa [#allocation6], 1

</llo_original>
